<compile_context>
chip_gen: v7x
topology: tpu7x:2x2x1
jax: 0.10.0
libtpu: 0.0.40
codegen_flags: <defaults>
</compile_context>

<pallas_src>
import functools
import numpy as np
import jax
import jax.numpy as jnp
from jax.experimental import pallas as pl
from jax.experimental.pallas import tpu as pltpu

_LRELU_SLOPE = 0.2
_BN_EPS = 1e-5
_K = 4            # every conv in this architecture is 4x4
_KK = _K * _K     # 16 taps


# ------------------------------ Pallas kernel ------------------------------

def _leaky_relu(x):
    # max(x, 0.2*x): one VALU op fewer than compare+select.
    return jnp.maximum(x, _LRELU_SLOPE * x)


def _make_disc_kernel(n_bn, batch, s_final):
    """Fused forward kernel.

    Ref order: x_col, W0, [S_stack_i, W_taps_i, bn_aff_i] * n_bn, Wf_rep, out.
    Activations are kept as (N*OH*OW, C) f32 values (rows = batch x spatial,
    channels on lanes) and never leave VMEM/vregs.
    """
    def kernel(*refs):
        x_ref = refs[0]          # (N*OH0*OW0, InC*16) bf16 im2col of the input
        w0_ref = refs[1]         # (InC*16, ndf)        bf16
        wf_ref = refs[-2]        # (N*16, C_last)       f32  final-conv taps
        o_ref = refs[-1]         # (N, 1)               f32

        # ---- layer 0: one im2col matmul, M = N*OH*OW fills the MXU rows ----
        h = jnp.dot(x_ref[...], w0_ref[...], preferred_element_type=jnp.float32)
        h = _leaky_relu(h)

        # ---- (conv -> BatchNorm(batch stats) -> LeakyReLU) blocks ----
        idx = 2
        for _ in range(n_bn):
            s_ref, w_ref, bn_ref = refs[idx], refs[idx + 1], refs[idx + 2]
            idx += 3
            m_out = s_ref.shape[0] // _KK          # N*OH*OW of this layer
            in_c = h.shape[1]
            out_c = w_ref.shape[1]
            h_bf = h.astype(jnp.bfloat16)

            y = jnp.zeros((m_out, out_c), jnp.float32)
            # 16 kernel taps processed as 4 groups of 4: one gather matmul per
            # group (0/1 selection rows = tap-stacked output positions), then
            # per-tap weight matmuls on tile-aligned static slices.
            for grp in range(4):
                g = jnp.dot(s_ref[grp * 4 * m_out:(grp + 1) * 4 * m_out, :],
                            h_bf, preferred_element_type=jnp.float32)
                g = g.astype(jnp.bfloat16)          # exact: gathered bf16 values
                for tt in range(4):
                    t = grp * 4 + tt
                    y = y + jnp.dot(
                        g[tt * m_out:(tt + 1) * m_out, :],
                        w_ref[t * in_c:(t + 1) * in_c, :].astype(jnp.bfloat16),
                        preferred_element_type=jnp.float32)

            # BatchNorm2d, train-mode batch stats (biased var), eps=1e-5.
            # Channels live on lanes -> stats are plain axis-0 sums, no matmul.
            bn = bn_ref[...]                        # (2, C): [gamma; beta]
            inv_cnt = 1.0 / float(m_out)
            mean = jnp.sum(y, axis=0, keepdims=True) * inv_cnt
            var = jnp.sum(y * y, axis=0, keepdims=True) * inv_cnt - mean * mean
            var = jnp.maximum(var, 0.0)             # guard rsqrt vs tiny negatives
            a = bn[0:1, :] * jax.lax.rsqrt(var + _BN_EPS)
            b = bn[1:2, :] - mean * a
            h = _leaky_relu(y * a + b)

        # ---- final 4x4 / stride-1 / pad-0 conv (full contraction) + sigmoid ----
        # out[n] = sum over the 16 spatial rows of sample n of <h_row, wf_row>.
        rowvals = jnp.sum(h * wf_ref[...], axis=1, keepdims=True)   # (N*16, 1)
        m = batch * s_final
        r_id = jax.lax.broadcasted_iota(jnp.int32, (batch, m), 0)
        c_id = jax.lax.broadcasted_iota(jnp.int32, (batch, m), 1)
        pool = jnp.logical_and(c_id >= r_id * s_final,
                               c_id < (r_id + 1) * s_final).astype(jnp.float32)
        logit = jnp.dot(pool, rowvals, preferred_element_type=jnp.float32)  # (N,1)

        # Numerically stable sigmoid; divides moved onto the EUP.
        z = jnp.exp(-jnp.abs(logit))
        inv = pl.reciprocal(1.0 + z, approx=True)
        o_ref[...] = jnp.where(logit >= 0, inv, z * inv)

    return kernel


# ------------------------------- JAX wrapper --------------------------------

def _im2col_input(x):
    """(N, C, H, W) -> (N*OH*OW, C*16) patches of a 4x4/stride-2/pad-1 conv.
    Column order is (c, ki, kj), matching w0.reshape(OutC, C*16).T."""
    n, c, hh, ww = x.shape
    oh, ow = hh // 2, ww // 2
    xp = jnp.pad(x, ((0, 0), (0, 0), (1, 1), (1, 1)))
    taps = []
    for i in range(_K):
        for j in range(_K):
            taps.append(xp[:, :, i:i + 2 * oh:2, j:j + 2 * ow:2])  # (N, C, OH, OW)
    cols = jnp.stack(taps, axis=-1)                 # (N, C, OH, OW, 16)
    cols = jnp.transpose(cols, (0, 2, 3, 1, 4))     # (N, OH, OW, C, 16)
    return cols.reshape(n * oh * ow, c * _KK)


@functools.partial(jax.jit, static_argnames=("n_bn",))
def discriminator_forward(x, packed_params, n_bn):
    """x: (N, nc, H, W) NCHW float32. packed_params: tuple from pack_*()."""
    n = x.shape[0]
    x_col = _im2col_input(x).astype(jnp.bfloat16)
    p = packed_params
    s_final = p[-1].shape[0] // n                   # = 16 (final 4x4 window)

    # Truthful cost estimate: actual conv FLOPs, not gather-matmul overcount.
    flops = 2 * x_col.shape[0] * x_col.shape[1] * p[0].shape[1]
    trans = 2 * n
    for l in range(n_bn):
        s_stk, w_stk = p[1 + 3 * l], p[2 + 3 * l]
        m_out = s_stk.shape[0] // _KK
        flops += 2 * m_out * w_stk.shape[0] * w_stk.shape[1]
        trans += w_stk.shape[1]
    wf = p[1 + 3 * n_bn]
    flops += 2 * wf.shape[0] * wf.shape[1]
    bytes_accessed = int(x_col.size) * x_col.dtype.itemsize + n * 4
    for arr in p:
        bytes_accessed += int(arr.size) * arr.dtype.itemsize

    out = pl.pallas_call(
        _make_disc_kernel(n_bn, n, s_final),
        out_shape=jax.ShapeDtypeStruct((n, 1), jnp.float32),
        in_specs=[pl.BlockSpec(memory_space=pltpu.MemorySpace.VMEM)]
                 * (1 + len(p)),
        out_specs=pl.BlockSpec(memory_space=pltpu.MemorySpace.VMEM),
        cost_estimate=pl.CostEstimate(flops=int(flops), transcendentals=int(trans),
                                      bytes_accessed=int(bytes_accessed)),
    )(x_col, *p)
    return out.reshape(n, 1, 1, 1)


# ------------------- init-time weight packing (NumPy, one-off) -------------

def feature_maps_multiplies(img_size):
    n_layers = int(np.log2(img_size)) - 3
    return [2 ** (i + 1) for i in range(n_layers)]


def _build_gather_stack(batch, h, w):
    """0/1 matrix S (16*M_out, M_in) for a 4x4 / stride-2 / pad-1 conv: block t
    of S @ act gathers, for every output row (n, oy, ox), the input row
    (n, 2oy+i-1, 2ox+j-1) of tap t=(i,j); out-of-bounds taps give zero rows."""
    oh, ow = h // 2, w // 2
    m_out, m_in = batch * oh * ow, batch * h * w
    s = np.zeros((_KK * m_out, m_in), np.float32)
    for i in range(_K):
        for j in range(_K):
            t = i * _K + j
            for b in range(batch):
                for oy in range(oh):
                    yy = 2 * oy + i - 1
                    if not (0 <= yy < h):
                        continue
                    for ox in range(ow):
                        xx = 2 * ox + j - 1
                        if not (0 <= xx < w):
                            continue
                        s[t * m_out + b * oh * ow + oy * ow + ox,
                          b * h * w + yy * w + xx] = 1.0
    return s


def init_discriminator_params(key, img_size, ndf, nc):
    """DCGAN weights_init: conv ~ N(0, 0.02); BN gamma ~ N(1, 0.02), beta = 0."""
    multiplies = feature_maps_multiplies(img_size)
    params = {}
    key, sub = jax.random.split(key)
    params["w0"] = 0.02 * jax.random.normal(sub, (ndf, nc, 4, 4), jnp.float32)
    for li, m in enumerate(multiplies):
        cin, cout = ndf * m // 2, ndf * m
        key, k1, k2 = jax.random.split(key, 3)
        params[f"w{li + 1}"] = 0.02 * jax.random.normal(k1, (cout, cin, 4, 4), jnp.float32)
        params[f"gamma{li + 1}"] = 1.0 + 0.02 * jax.random.normal(k2, (cout,), jnp.float32)
        params[f"beta{li + 1}"] = jnp.zeros((cout,), jnp.float32)
    key, sub = jax.random.split(key)
    params["w_final"] = 0.02 * jax.random.normal(
        sub, (1, ndf * multiplies[-1], 4, 4), jnp.float32)
    return params, multiplies


def pack_discriminator_params(params, multiplies, img_size, batch):
    """One-time packing for a fixed batch size:
      - layer-0 weight as (nc*16, ndf) bf16 (matches wrapper im2col columns),
      - per BN layer: tap-stacked 0/1 gather matrix (bf16), tap-stacked weights
        (16*InC, OutC) f32 (8-row tile-aligned slices, cast to bf16 in-kernel),
        and [gamma; beta] as one (2, C) f32 operand,
      - final conv taps (16, C_last) tiled over batch, f32."""
    packed = []
    w0 = np.asarray(params["w0"], np.float32)                  # (ndf, nc, 4, 4)
    ndf = w0.shape[0]
    packed.append(jnp.asarray(w0.reshape(ndf, -1).T, jnp.bfloat16))   # (nc*16, ndf)
    h = w = img_size // 2
    cin = ndf
    for li, _ in enumerate(multiplies):
        wi = np.asarray(params[f"w{li + 1}"], np.float32)      # (cout, cin, 4, 4)
        cout = wi.shape[0]
        packed.append(jnp.asarray(_build_gather_stack(batch, h, w), jnp.bfloat16))
        wsv = np.zeros((_KK * cin, cout), np.float32)
        for i in range(_K):
            for j in range(_K):
                t = i * _K + j
                wsv[t * cin:(t + 1) * cin, :] = wi[:, :, i, j].T
        packed.append(jnp.asarray(wsv, jnp.float32))
        bn = np.stack([np.asarray(params[f"gamma{li + 1}"], np.float32),
                       np.asarray(params[f"beta{li + 1}"], np.float32)], axis=0)
        packed.append(jnp.asarray(bn, jnp.float32))            # (2, cout)
        h, w, cin = h // 2, w // 2, cout
    assert h == 4 and w == 4, "final conv expects a 4x4 feature map"
    wf = np.asarray(params["w_final"], np.float32)[0]          # (cin, 4, 4)
    wf_mat = wf.transpose(1, 2, 0).reshape(h * w, cin)         # (16, cin)
    packed.append(jnp.asarray(np.tile(wf_mat, (batch, 1)), jnp.float32))
    return tuple(packed)


# --------------------------- pure-JAX reference -----------------------------

def _reference_forward(x, params, multiplies):
    def conv(h, w, stride, pad):
        return jax.lax.conv_general_dilated(
            h, w, window_strides=(stride, stride),
            padding=((pad, pad), (pad, pad)),
            dimension_numbers=("NCHW", "OIHW", "NCHW"))

    h = conv(x, params["w0"], 2, 1)
    h = jnp.where(h > 0, h, _LRELU_SLOPE * h)
    for li, _ in enumerate(multiplies):
        h = conv(h, params[f"w{li + 1}"], 2, 1)
        mean = jnp.mean(h, axis=(0, 2, 3), keepdims=True)
        var = jnp.mean((h - mean) ** 2, axis=(0, 2, 3), keepdims=True)
        g = params[f"gamma{li + 1}"].reshape(1, -1, 1, 1)
        b = params[f"beta{li + 1}"].reshape(1, -1, 1, 1)
        h = (h - mean) * jax.lax.rsqrt(var + _BN_EPS) * g + b
        h = jnp.where(h > 0, h, _LRELU_SLOPE * h)
    h = conv(h, params["w_final"], 1, 0)
    return 1.0 / (1.0 + jnp.exp(-h))


# ----------------------------------- main -----------------------------------

if __name__ == "__main__":
    img_size, ndf, nc, batch = 16, 8, 4, 2
    key = jax.random.PRNGKey(0)
    key, xkey = jax.random.split(key)
    x = jax.random.normal(xkey, (batch, nc, img_size, img_size), jnp.float32)

    raw_params, multiplies = init_discriminator_params(key, img_size, ndf, nc)
    packed = pack_discriminator_params(raw_params, multiplies, img_size, batch)

    out = discriminator_forward(x, packed, len(multiplies))
    out = jax.block_until_ready(out)

    assert out.shape == (batch, 1, 1, 1), out.shape
    assert bool(jnp.all((out >= 0.0) & (out <= 1.0)))

    ref = jax.block_until_ready(_reference_forward(x, raw_params, multiplies))
    # bf16 MXU operands vs. f32 reference -> loose tolerance on sigmoid output
    # (intentional; acceptable for a GAN discriminator forward).
    assert bool(jnp.max(jnp.abs(out - ref)) < 5e-2), (np.asarray(out), np.asarray(ref))

    print("KERNEL_OK")
</pallas_src>

<mosaic_0001>
module attributes {stable_mosaic.version = 11 : i64} {
  func.func @kernel(%arg0: memref<128x64xbf16, #tpu.memory_space<vmem>>, %arg1: memref<64x8xbf16, #tpu.memory_space<vmem>>, %arg2: memref<512x128xbf16, #tpu.memory_space<vmem>>, %arg3: memref<128x16xf32, #tpu.memory_space<vmem>>, %arg4: memref<2x16xf32, #tpu.memory_space<vmem>>, %arg5: memref<32x16xf32, #tpu.memory_space<vmem>>, %arg6: memref<2x1xf32, #tpu.memory_space<vmem>>) attributes {dimension_semantics = [], scalar_prefetch = 0 : i64, scratch_operands = 0 : i64, tpu.core_type = #tpu.core_type<tc>} {
    %c0 = arith.constant 0 : index
    %c0_0 = arith.constant 0 : index
    %0 = vector.load %arg0[%c0, %c0_0] : memref<128x64xbf16, #tpu.memory_space<vmem>>, vector<128x64xbf16>
    %c0_1 = arith.constant 0 : index
    %c0_2 = arith.constant 0 : index
    %1 = vector.load %arg1[%c0_1, %c0_2] : memref<64x8xbf16, #tpu.memory_space<vmem>>, vector<64x8xbf16>
    %cst = arith.constant dense<0.000000e+00> : vector<128x8xf32>
    %2 = tpu.matmul %0, %1, %cst {dimension_numbers = #tpu.dot_dimension_numbers<[1], [0], [0], [1], [0, 0, 1, 1], [], []>} : vector<128x64xbf16>, vector<64x8xbf16>, vector<128x8xf32> -> vector<128x8xf32>
    %cst_3 = arith.constant 2.000000e-01 : f32
    %3 = vector.broadcast %cst_3 : f32 to vector<128x8xf32>
    %4 = arith.mulf %3, %2 : vector<128x8xf32>
    %5 = arith.maximumf %2, %4 : vector<128x8xf32>
    %6 = arith.truncf %5 : vector<128x8xf32> to vector<128x8xbf16>
    %cst_4 = arith.constant 0.000000e+00 : f32
    %7 = vector.broadcast %cst_4 : f32 to vector<32x16xf32>
    %c0_5 = arith.constant 0 : index
    %c0_6 = arith.constant 0 : index
    %8 = vector.load %arg2[%c0_5, %c0_6] : memref<512x128xbf16, #tpu.memory_space<vmem>>, vector<128x128xbf16>
    %cst_7 = arith.constant dense<0.000000e+00> : vector<128x8xf32>
    %9 = tpu.matmul %8, %6, %cst_7 {dimension_numbers = #tpu.dot_dimension_numbers<[1], [0], [0], [1], [0, 0, 1, 1], [], []>} : vector<128x128xbf16>, vector<128x8xbf16>, vector<128x8xf32> -> vector<128x8xf32>
    %10 = arith.truncf %9 : vector<128x8xf32> to vector<128x8xbf16>
    %11 = vector.extract_strided_slice %10 {offsets = [0, 0], sizes = [32, 8], strides = [1, 1]} : vector<128x8xbf16> to vector<32x8xbf16>
    %c0_8 = arith.constant 0 : index
    %c0_9 = arith.constant 0 : index
    %12 = vector.load %arg3[%c0_8, %c0_9] : memref<128x16xf32, #tpu.memory_space<vmem>>, vector<8x16xf32>
    %13 = arith.truncf %12 : vector<8x16xf32> to vector<8x16xbf16>
    %cst_10 = arith.constant dense<0.000000e+00> : vector<32x16xf32>
    %14 = tpu.matmul %11, %13, %cst_10 {dimension_numbers = #tpu.dot_dimension_numbers<[1], [0], [0], [1], [0, 0, 1, 1], [], []>} : vector<32x8xbf16>, vector<8x16xbf16>, vector<32x16xf32> -> vector<32x16xf32>
    %15 = arith.addf %7, %14 : vector<32x16xf32>
    %16 = vector.extract_strided_slice %10 {offsets = [32, 0], sizes = [32, 8], strides = [1, 1]} : vector<128x8xbf16> to vector<32x8xbf16>
    %c8 = arith.constant 8 : index
    %c0_11 = arith.constant 0 : index
    %17 = vector.load %arg3[%c8, %c0_11] : memref<128x16xf32, #tpu.memory_space<vmem>>, vector<8x16xf32>
    %18 = arith.truncf %17 : vector<8x16xf32> to vector<8x16xbf16>
    %cst_12 = arith.constant dense<0.000000e+00> : vector<32x16xf32>
    %19 = tpu.matmul %16, %18, %cst_12 {dimension_numbers = #tpu.dot_dimension_numbers<[1], [0], [0], [1], [0, 0, 1, 1], [], []>} : vector<32x8xbf16>, vector<8x16xbf16>, vector<32x16xf32> -> vector<32x16xf32>
    %20 = arith.addf %15, %19 : vector<32x16xf32>
    %21 = vector.extract_strided_slice %10 {offsets = [64, 0], sizes = [32, 8], strides = [1, 1]} : vector<128x8xbf16> to vector<32x8xbf16>
    %c16 = arith.constant 16 : index
    %c0_13 = arith.constant 0 : index
    %22 = vector.load %arg3[%c16, %c0_13] : memref<128x16xf32, #tpu.memory_space<vmem>>, vector<8x16xf32>
    %23 = arith.truncf %22 : vector<8x16xf32> to vector<8x16xbf16>
    %cst_14 = arith.constant dense<0.000000e+00> : vector<32x16xf32>
    %24 = tpu.matmul %21, %23, %cst_14 {dimension_numbers = #tpu.dot_dimension_numbers<[1], [0], [0], [1], [0, 0, 1, 1], [], []>} : vector<32x8xbf16>, vector<8x16xbf16>, vector<32x16xf32> -> vector<32x16xf32>
    %25 = arith.addf %20, %24 : vector<32x16xf32>
    %26 = vector.extract_strided_slice %10 {offsets = [96, 0], sizes = [32, 8], strides = [1, 1]} : vector<128x8xbf16> to vector<32x8xbf16>
    %c24 = arith.constant 24 : index
    %c0_15 = arith.constant 0 : index
    %27 = vector.load %arg3[%c24, %c0_15] : memref<128x16xf32, #tpu.memory_space<vmem>>, vector<8x16xf32>
    %28 = arith.truncf %27 : vector<8x16xf32> to vector<8x16xbf16>
    %cst_16 = arith.constant dense<0.000000e+00> : vector<32x16xf32>
    %29 = tpu.matmul %26, %28, %cst_16 {dimension_numbers = #tpu.dot_dimension_numbers<[1], [0], [0], [1], [0, 0, 1, 1], [], []>} : vector<32x8xbf16>, vector<8x16xbf16>, vector<32x16xf32> -> vector<32x16xf32>
    %30 = arith.addf %25, %29 : vector<32x16xf32>
    %c128 = arith.constant 128 : index
    %c0_17 = arith.constant 0 : index
    %31 = vector.load %arg2[%c128, %c0_17] : memref<512x128xbf16, #tpu.memory_space<vmem>>, vector<128x128xbf16>
    %cst_18 = arith.constant dense<0.000000e+00> : vector<128x8xf32>
    %32 = tpu.matmul %31, %6, %cst_18 {dimension_numbers = #tpu.dot_dimension_numbers<[1], [0], [0], [1], [0, 0, 1, 1], [], []>} : vector<128x128xbf16>, vector<128x8xbf16>, vector<128x8xf32> -> vector<128x8xf32>
    %33 = arith.truncf %32 : vector<128x8xf32> to vector<128x8xbf16>
    %34 = vector.extract_strided_slice %33 {offsets = [0, 0], sizes = [32, 8], strides = [1, 1]} : vector<128x8xbf16> to vector<32x8xbf16>
    %c32 = arith.constant 32 : index
    %c0_19 = arith.constant 0 : index
    %35 = vector.load %arg3[%c32, %c0_19] : memref<128x16xf32, #tpu.memory_space<vmem>>, vector<8x16xf32>
    %36 = arith.truncf %35 : vector<8x16xf32> to vector<8x16xbf16>
    %cst_20 = arith.constant dense<0.000000e+00> : vector<32x16xf32>
    %37 = tpu.matmul %34, %36, %cst_20 {dimension_numbers = #tpu.dot_dimension_numbers<[1], [0], [0], [1], [0, 0, 1, 1], [], []>} : vector<32x8xbf16>, vector<8x16xbf16>, vector<32x16xf32> -> vector<32x16xf32>
    %38 = arith.addf %30, %37 : vector<32x16xf32>
    %39 = vector.extract_strided_slice %33 {offsets = [32, 0], sizes = [32, 8], strides = [1, 1]} : vector<128x8xbf16> to vector<32x8xbf16>
    %c40 = arith.constant 40 : index
    %c0_21 = arith.constant 0 : index
    %40 = vector.load %arg3[%c40, %c0_21] : memref<128x16xf32, #tpu.memory_space<vmem>>, vector<8x16xf32>
    %41 = arith.truncf %40 : vector<8x16xf32> to vector<8x16xbf16>
    %cst_22 = arith.constant dense<0.000000e+00> : vector<32x16xf32>
    %42 = tpu.matmul %39, %41, %cst_22 {dimension_numbers = #tpu.dot_dimension_numbers<[1], [0], [0], [1], [0, 0, 1, 1], [], []>} : vector<32x8xbf16>, vector<8x16xbf16>, vector<32x16xf32> -> vector<32x16xf32>
    %43 = arith.addf %38, %42 : vector<32x16xf32>
    %44 = vector.extract_strided_slice %33 {offsets = [64, 0], sizes = [32, 8], strides = [1, 1]} : vector<128x8xbf16> to vector<32x8xbf16>
    %c48 = arith.constant 48 : index
    %c0_23 = arith.constant 0 : index
    %45 = vector.load %arg3[%c48, %c0_23] : memref<128x16xf32, #tpu.memory_space<vmem>>, vector<8x16xf32>
    %46 = arith.truncf %45 : vector<8x16xf32> to vector<8x16xbf16>
    %cst_24 = arith.constant dense<0.000000e+00> : vector<32x16xf32>
    %47 = tpu.matmul %44, %46, %cst_24 {dimension_numbers = #tpu.dot_dimension_numbers<[1], [0], [0], [1], [0, 0, 1, 1], [], []>} : vector<32x8xbf16>, vector<8x16xbf16>, vector<32x16xf32> -> vector<32x16xf32>
    %48 = arith.addf %43, %47 : vector<32x16xf32>
    %49 = vector.extract_strided_slice %33 {offsets = [96, 0], sizes = [32, 8], strides = [1, 1]} : vector<128x8xbf16> to vector<32x8xbf16>
    %c56 = arith.constant 56 : index
    %c0_25 = arith.constant 0 : index
    %50 = vector.load %arg3[%c56, %c0_25] : memref<128x16xf32, #tpu.memory_space<vmem>>, vector<8x16xf32>
    %51 = arith.truncf %50 : vector<8x16xf32> to vector<8x16xbf16>
    %cst_26 = arith.constant dense<0.000000e+00> : vector<32x16xf32>
    %52 = tpu.matmul %49, %51, %cst_26 {dimension_numbers = #tpu.dot_dimension_numbers<[1], [0], [0], [1], [0, 0, 1, 1], [], []>} : vector<32x8xbf16>, vector<8x16xbf16>, vector<32x16xf32> -> vector<32x16xf32>
    %53 = arith.addf %48, %52 : vector<32x16xf32>
    %c256 = arith.constant 256 : index
    %c0_27 = arith.constant 0 : index
    %54 = vector.load %arg2[%c256, %c0_27] : memref<512x128xbf16, #tpu.memory_space<vmem>>, vector<128x128xbf16>
    %cst_28 = arith.constant dense<0.000000e+00> : vector<128x8xf32>
    %55 = tpu.matmul %54, %6, %cst_28 {dimension_numbers = #tpu.dot_dimension_numbers<[1], [0], [0], [1], [0, 0, 1, 1], [], []>} : vector<128x128xbf16>, vector<128x8xbf16>, vector<128x8xf32> -> vector<128x8xf32>
    %56 = arith.truncf %55 : vector<128x8xf32> to vector<128x8xbf16>
    %57 = vector.extract_strided_slice %56 {offsets = [0, 0], sizes = [32, 8], strides = [1, 1]} : vector<128x8xbf16> to vector<32x8xbf16>
    %c64 = arith.constant 64 : index
    %c0_29 = arith.constant 0 : index
    %58 = vector.load %arg3[%c64, %c0_29] : memref<128x16xf32, #tpu.memory_space<vmem>>, vector<8x16xf32>
    %59 = arith.truncf %58 : vector<8x16xf32> to vector<8x16xbf16>
    %cst_30 = arith.constant dense<0.000000e+00> : vector<32x16xf32>
    %60 = tpu.matmul %57, %59, %cst_30 {dimension_numbers = #tpu.dot_dimension_numbers<[1], [0], [0], [1], [0, 0, 1, 1], [], []>} : vector<32x8xbf16>, vector<8x16xbf16>, vector<32x16xf32> -> vector<32x16xf32>
    %61 = arith.addf %53, %60 : vector<32x16xf32>
    %62 = vector.extract_strided_slice %56 {offsets = [32, 0], sizes = [32, 8], strides = [1, 1]} : vector<128x8xbf16> to vector<32x8xbf16>
    %c72 = arith.constant 72 : index
    %c0_31 = arith.constant 0 : index
    %63 = vector.load %arg3[%c72, %c0_31] : memref<128x16xf32, #tpu.memory_space<vmem>>, vector<8x16xf32>
    %64 = arith.truncf %63 : vector<8x16xf32> to vector<8x16xbf16>
    %cst_32 = arith.constant dense<0.000000e+00> : vector<32x16xf32>
    %65 = tpu.matmul %62, %64, %cst_32 {dimension_numbers = #tpu.dot_dimension_numbers<[1], [0], [0], [1], [0, 0, 1, 1], [], []>} : vector<32x8xbf16>, vector<8x16xbf16>, vector<32x16xf32> -> vector<32x16xf32>
    %66 = arith.addf %61, %65 : vector<32x16xf32>
    %67 = vector.extract_strided_slice %56 {offsets = [64, 0], sizes = [32, 8], strides = [1, 1]} : vector<128x8xbf16> to vector<32x8xbf16>
    %c80 = arith.constant 80 : index
    %c0_33 = arith.constant 0 : index
    %68 = vector.load %arg3[%c80, %c0_33] : memref<128x16xf32, #tpu.memory_space<vmem>>, vector<8x16xf32>
    %69 = arith.truncf %68 : vector<8x16xf32> to vector<8x16xbf16>
    %cst_34 = arith.constant dense<0.000000e+00> : vector<32x16xf32>
    %70 = tpu.matmul %67, %69, %cst_34 {dimension_numbers = #tpu.dot_dimension_numbers<[1], [0], [0], [1], [0, 0, 1, 1], [], []>} : vector<32x8xbf16>, vector<8x16xbf16>, vector<32x16xf32> -> vector<32x16xf32>
    %71 = arith.addf %66, %70 : vector<32x16xf32>
    %72 = vector.extract_strided_slice %56 {offsets = [96, 0], sizes = [32, 8], strides = [1, 1]} : vector<128x8xbf16> to vector<32x8xbf16>
    %c88 = arith.constant 88 : index
    %c0_35 = arith.constant 0 : index
    %73 = vector.load %arg3[%c88, %c0_35] : memref<128x16xf32, #tpu.memory_space<vmem>>, vector<8x16xf32>
    %74 = arith.truncf %73 : vector<8x16xf32> to vector<8x16xbf16>
    %cst_36 = arith.constant dense<0.000000e+00> : vector<32x16xf32>
    %75 = tpu.matmul %72, %74, %cst_36 {dimension_numbers = #tpu.dot_dimension_numbers<[1], [0], [0], [1], [0, 0, 1, 1], [], []>} : vector<32x8xbf16>, vector<8x16xbf16>, vector<32x16xf32> -> vector<32x16xf32>
    %76 = arith.addf %71, %75 : vector<32x16xf32>
    %c384 = arith.constant 384 : index
    %c0_37 = arith.constant 0 : index
    %77 = vector.load %arg2[%c384, %c0_37] : memref<512x128xbf16, #tpu.memory_space<vmem>>, vector<128x128xbf16>
    %cst_38 = arith.constant dense<0.000000e+00> : vector<128x8xf32>
    %78 = tpu.matmul %77, %6, %cst_38 {dimension_numbers = #tpu.dot_dimension_numbers<[1], [0], [0], [1], [0, 0, 1, 1], [], []>} : vector<128x128xbf16>, vector<128x8xbf16>, vector<128x8xf32> -> vector<128x8xf32>
    %79 = arith.truncf %78 : vector<128x8xf32> to vector<128x8xbf16>
    %80 = vector.extract_strided_slice %79 {offsets = [0, 0], sizes = [32, 8], strides = [1, 1]} : vector<128x8xbf16> to vector<32x8xbf16>
    %c96 = arith.constant 96 : index
    %c0_39 = arith.constant 0 : index
    %81 = vector.load %arg3[%c96, %c0_39] : memref<128x16xf32, #tpu.memory_space<vmem>>, vector<8x16xf32>
    %82 = arith.truncf %81 : vector<8x16xf32> to vector<8x16xbf16>
    %cst_40 = arith.constant dense<0.000000e+00> : vector<32x16xf32>
    %83 = tpu.matmul %80, %82, %cst_40 {dimension_numbers = #tpu.dot_dimension_numbers<[1], [0], [0], [1], [0, 0, 1, 1], [], []>} : vector<32x8xbf16>, vector<8x16xbf16>, vector<32x16xf32> -> vector<32x16xf32>
    %84 = arith.addf %76, %83 : vector<32x16xf32>
    %85 = vector.extract_strided_slice %79 {offsets = [32, 0], sizes = [32, 8], strides = [1, 1]} : vector<128x8xbf16> to vector<32x8xbf16>
    %c104 = arith.constant 104 : index
    %c0_41 = arith.constant 0 : index
    %86 = vector.load %arg3[%c104, %c0_41] : memref<128x16xf32, #tpu.memory_space<vmem>>, vector<8x16xf32>
    %87 = arith.truncf %86 : vector<8x16xf32> to vector<8x16xbf16>
    %cst_42 = arith.constant dense<0.000000e+00> : vector<32x16xf32>
    %88 = tpu.matmul %85, %87, %cst_42 {dimension_numbers = #tpu.dot_dimension_numbers<[1], [0], [0], [1], [0, 0, 1, 1], [], []>} : vector<32x8xbf16>, vector<8x16xbf16>, vector<32x16xf32> -> vector<32x16xf32>
    %89 = arith.addf %84, %88 : vector<32x16xf32>
    %90 = vector.extract_strided_slice %79 {offsets = [64, 0], sizes = [32, 8], strides = [1, 1]} : vector<128x8xbf16> to vector<32x8xbf16>
    %c112 = arith.constant 112 : index
    %c0_43 = arith.constant 0 : index
    %91 = vector.load %arg3[%c112, %c0_43] : memref<128x16xf32, #tpu.memory_space<vmem>>, vector<8x16xf32>
    %92 = arith.truncf %91 : vector<8x16xf32> to vector<8x16xbf16>
    %cst_44 = arith.constant dense<0.000000e+00> : vector<32x16xf32>
    %93 = tpu.matmul %90, %92, %cst_44 {dimension_numbers = #tpu.dot_dimension_numbers<[1], [0], [0], [1], [0, 0, 1, 1], [], []>} : vector<32x8xbf16>, vector<8x16xbf16>, vector<32x16xf32> -> vector<32x16xf32>
    %94 = arith.addf %89, %93 : vector<32x16xf32>
    %95 = vector.extract_strided_slice %79 {offsets = [96, 0], sizes = [32, 8], strides = [1, 1]} : vector<128x8xbf16> to vector<32x8xbf16>
    %c120 = arith.constant 120 : index
    %c0_45 = arith.constant 0 : index
    %96 = vector.load %arg3[%c120, %c0_45] : memref<128x16xf32, #tpu.memory_space<vmem>>, vector<8x16xf32>
    %97 = arith.truncf %96 : vector<8x16xf32> to vector<8x16xbf16>
    %cst_46 = arith.constant dense<0.000000e+00> : vector<32x16xf32>
    %98 = tpu.matmul %95, %97, %cst_46 {dimension_numbers = #tpu.dot_dimension_numbers<[1], [0], [0], [1], [0, 0, 1, 1], [], []>} : vector<32x8xbf16>, vector<8x16xbf16>, vector<32x16xf32> -> vector<32x16xf32>
    %99 = arith.addf %94, %98 : vector<32x16xf32>
    %c0_47 = arith.constant 0 : index
    %c0_48 = arith.constant 0 : index
    %100 = vector.load %arg4[%c0_47, %c0_48] : memref<2x16xf32, #tpu.memory_space<vmem>>, vector<2x16xf32>
    %cst_49 = arith.constant dense<0.000000e+00> : vector<16xf32>
    %101 = vector.multi_reduction <add>, %99, %cst_49 [0] : vector<32x16xf32> to vector<16xf32>
    %102 = vector.shape_cast %101 : vector<16xf32> to vector<1x16xf32>
    %cst_50 = arith.constant 3.125000e-02 : f32
    %103 = vector.broadcast %cst_50 : f32 to vector<1x16xf32>
    %104 = arith.mulf %102, %103 : vector<1x16xf32>
    %105 = arith.mulf %99, %99 : vector<32x16xf32>
    %cst_51 = arith.constant dense<0.000000e+00> : vector<16xf32>
    %106 = vector.multi_reduction <add>, %105, %cst_51 [0] : vector<32x16xf32> to vector<16xf32>
    %107 = vector.shape_cast %106 : vector<16xf32> to vector<1x16xf32>
    %cst_52 = arith.constant 3.125000e-02 : f32
    %108 = vector.broadcast %cst_52 : f32 to vector<1x16xf32>
    %109 = arith.mulf %107, %108 : vector<1x16xf32>
    %110 = arith.mulf %104, %104 : vector<1x16xf32>
    %111 = arith.subf %109, %110 : vector<1x16xf32>
    %cst_53 = arith.constant 0.000000e+00 : f32
    %112 = vector.broadcast %cst_53 : f32 to vector<1x16xf32>
    %113 = arith.maximumf %111, %112 : vector<1x16xf32>
    %114 = vector.extract_strided_slice %100 {offsets = [0, 0], sizes = [1, 16], strides = [1, 1]} : vector<2x16xf32> to vector<1x16xf32>
    %cst_54 = arith.constant 9.99999974E-6 : f32
    %115 = vector.broadcast %cst_54 : f32 to vector<1x16xf32>
    %116 = arith.addf %113, %115 : vector<1x16xf32>
    %117 = math.rsqrt %116 : vector<1x16xf32>
    %118 = arith.mulf %114, %117 : vector<1x16xf32>
    %119 = vector.extract_strided_slice %100 {offsets = [1, 0], sizes = [1, 16], strides = [1, 1]} : vector<2x16xf32> to vector<1x16xf32>
    %120 = arith.mulf %104, %118 : vector<1x16xf32>
    %121 = arith.subf %119, %120 : vector<1x16xf32>
    %122 = vector.broadcast %118 : vector<1x16xf32> to vector<32x16xf32>
    %123 = arith.mulf %99, %122 : vector<32x16xf32>
    %124 = vector.broadcast %121 : vector<1x16xf32> to vector<32x16xf32>
    %125 = arith.addf %123, %124 : vector<32x16xf32>
    %cst_55 = arith.constant 2.000000e-01 : f32
    %126 = vector.broadcast %cst_55 : f32 to vector<32x16xf32>
    %127 = arith.mulf %126, %125 : vector<32x16xf32>
    %128 = arith.maximumf %125, %127 : vector<32x16xf32>
    %c0_56 = arith.constant 0 : index
    %c0_57 = arith.constant 0 : index
    %129 = vector.load %arg5[%c0_56, %c0_57] : memref<32x16xf32, #tpu.memory_space<vmem>>, vector<32x16xf32>
    %130 = arith.mulf %128, %129 : vector<32x16xf32>
    %cst_58 = arith.constant dense<0.000000e+00> : vector<32xf32>
    %131 = vector.multi_reduction <add>, %130, %cst_58 [1] : vector<32x16xf32> to vector<32xf32>
    %132 = vector.shape_cast %131 : vector<32xf32> to vector<32x1xf32>
    %133 = tpu.iota {dimensions = array<i32: 0>} : vector<2x32xi32>
    %134 = tpu.iota {dimensions = array<i32: 1>} : vector<2x32xi32>
    %c16_i32 = arith.constant 16 : i32
    %135 = vector.broadcast %c16_i32 : i32 to vector<2x32xi32>
    %136 = arith.muli %133, %135 : vector<2x32xi32>
    %137 = arith.cmpi sge, %134, %136 : vector<2x32xi32>
    %c1_i32 = arith.constant 1 : i32
    %138 = vector.broadcast %c1_i32 : i32 to vector<2x32xi32>
    %139 = arith.addi %133, %138 : vector<2x32xi32>
    %c16_i32_59 = arith.constant 16 : i32
    %140 = vector.broadcast %c16_i32_59 : i32 to vector<2x32xi32>
    %141 = arith.muli %139, %140 : vector<2x32xi32>
    %142 = arith.cmpi slt, %134, %141 : vector<2x32xi32>
    %143 = arith.andi %137, %142 : vector<2x32xi1>
    %144 = arith.extui %143 : vector<2x32xi1> to vector<2x32xi32>
    %145 = arith.sitofp %144 : vector<2x32xi32> to vector<2x32xf32>
    %cst_60 = arith.constant dense<0.000000e+00> : vector<2x1xf32>
    %146 = tpu.matmul %145, %132, %cst_60 {dimension_numbers = #tpu.dot_dimension_numbers<[1], [0], [0], [1], [0, 0, 1, 1], [], []>} : vector<2x32xf32>, vector<32x1xf32>, vector<2x1xf32> -> vector<2x1xf32>
    %147 = math.absf %146 : vector<2x1xf32>
    %cst_61 = arith.constant 0.000000e+00 : f32
    %148 = vector.broadcast %cst_61 : f32 to vector<2x1xf32>
    %149 = arith.subf %148, %147 : vector<2x1xf32>
    %150 = math.exp %149 : vector<2x1xf32>
    %cst_62 = arith.constant 1.000000e+00 : f32
    %151 = vector.broadcast %cst_62 : f32 to vector<2x1xf32>
    %152 = arith.addf %151, %150 : vector<2x1xf32>
    %153 = tpu.reciprocal %152 {approx = true} : vector<2x1xf32> -> vector<2x1xf32>
    %cst_63 = arith.constant 0.000000e+00 : f32
    %154 = vector.broadcast %cst_63 : f32 to vector<2x1xf32>
    %155 = arith.cmpf oge, %146, %154 : vector<2x1xf32>
    %156 = arith.mulf %150, %153 : vector<2x1xf32>
    %157 = arith.select %155, %153, %156 : vector<2x1xi1>, vector<2x1xf32>
    %c0_64 = arith.constant 0 : index
    %c0_65 = arith.constant 0 : index
    %158 = vector.load %arg6[%c0_64, %c0_65] : memref<2x1xf32, #tpu.memory_space<vmem>>, vector<2x1xf32>
    tpu.vector_store %arg6[%c0_64, %c0_65], %157 {strides = array<i32>} : memref<2x1xf32, #tpu.memory_space<vmem>>, vector<2x1xf32>,
    return
  }
}

</mosaic_0001>

<llo_original>
// kernel: discriminator_forward.1
$region0: #{discriminator_forward.1}
  #allocation0 [shape = 'u32[]', space=smem, size = 0x4, offset = 0x4, fixed_abs, tag = 'smem constant byte address 0x4 - core index']
  #allocation1 [shape = 'u32[144,128]{1,0:T(1,128)}', space=vmem, size = 0x12000, scoped, tag = 'internal scratch']
  %s0 = inlined_call_operand.vmem [shape: bf16[128,64], index: 0, kind: input, shape index: {}]
  %s1 = inlined_call_operand.vmem [shape: bf16[64,8], index: 1, kind: input, shape index: {}]
  %s2 = inlined_call_operand.vmem [shape: bf16[512,128], index: 2, kind: input, shape index: {}]
  %s3 = inlined_call_operand.vmem [shape: f32[128,16], index: 3, kind: input, shape index: {}]
  %s4 = inlined_call_operand.vmem [shape: f32[2,16], index: 4, kind: input, shape index: {}]
  %s5 = inlined_call_operand.vmem [shape: f32[32,16], index: 5, kind: input, shape index: {}]
  %s6 = inlined_call_operand.vmem [shape: f32[2,1], index: 6, kind: output, shape index: {}]
  %s7 = sld [smem:[#allocation0]]
  $region34: #{discriminator_forward.1} parent=0
    _
  %s9 = ssub.s32 1, %s7
  %s10 = scalar_select 0, %s9, %s7
  // Predicated region
  $region2: #{discriminator_forward.1} parent=0 // pred_check
    _
  $region3: #{discriminator_forward.1} parent=0 // pred_check_branch
    %12 = sbr.rel (0) target = $region5
  $region4: #{discriminator_forward.1} parent=0 // pred_region
    _
  $region5: #{discriminator_forward.1} parent=0 // pred_fallthru
    _
  // Predicated region
  $region6: #{discriminator_forward.1} parent=0 // pred_check
    _
  $region7: #{discriminator_forward.1} parent=0 // pred_check_branch
    %14 = sbr.rel (0) target = $region9
  $region8: #{discriminator_forward.1} parent=0 // pred_region
    _
  $region9: #{discriminator_forward.1} parent=0 // pred_fallthru
    _
  // Predicated region
  $region10: #{discriminator_forward.1} parent=0 // pred_check
    _
  $region11: #{discriminator_forward.1} parent=0 // pred_check_branch
    %16 = sbr.rel (0) target = $region13
  $region12: #{discriminator_forward.1} parent=0 // pred_region
    _
  $region13: #{discriminator_forward.1} parent=0 // pred_fallthru
    _
  // Predicated region
  $region14: #{discriminator_forward.1} parent=0 // pred_check
    _
  $region15: #{discriminator_forward.1} parent=0 // pred_check_branch
    %18 = sbr.rel (0) target = $region17
  $region16: #{discriminator_forward.1} parent=0 // pred_region
    _
  $region17: #{discriminator_forward.1} parent=0 // pred_fallthru
    _
  // Predicated region
  $region18: #{discriminator_forward.1} parent=0 // pred_check
    _
  $region19: #{discriminator_forward.1} parent=0 // pred_check_branch
    %20 = sbr.rel (0) target = $region21
  $region20: #{discriminator_forward.1} parent=0 // pred_region
    _
  $region21: #{discriminator_forward.1} parent=0 // pred_fallthru
    _
  // Predicated region
  $region22: #{discriminator_forward.1} parent=0 // pred_check
    _
  $region23: #{discriminator_forward.1} parent=0 // pred_check_branch
    %22 = sbr.rel (0) target = $region25
  $region24: #{discriminator_forward.1} parent=0 // pred_region
    _
  $region25: #{discriminator_forward.1} parent=0 // pred_fallthru
    _
  %v24 = vld [vmem:[%s0] sm:$0xf]
  %v25 = vld [vmem:[%s0 + $0x4] sm:$0xf]
  %v26 = vld [vmem:[%s0 + $0x8] sm:$0xf]
  %v27 = vld [vmem:[%s0 + $0xc] sm:$0xf]
  %v28 = vld [vmem:[%s0 + $0x10] sm:$0xf]
  %v29 = vld [vmem:[%s0 + $0x14] sm:$0xf]
  %v30 = vld [vmem:[%s0 + $0x18] sm:$0xf]
  %v31 = vld [vmem:[%s0 + $0x1c] sm:$0xf]
  %v32 = vld [vmem:[%s0 + $0x20] sm:$0xf]
  %v33 = vld [vmem:[%s0 + $0x24] sm:$0xf]
  %v34 = vld [vmem:[%s0 + $0x28] sm:$0xf]
  %v35 = vld [vmem:[%s0 + $0x2c] sm:$0xf]
  %v36 = vld [vmem:[%s0 + $0x30] sm:$0xf]
  %v37 = vld [vmem:[%s0 + $0x34] sm:$0xf]
  %v38 = vld [vmem:[%s0 + $0x38] sm:$0xf]
  %v39 = vld [vmem:[%s0 + $0x3c] sm:$0xf]
  %v40 = vld [vmem:[%s1] sm:$0xf]
  %v41 = vld [vmem:[%s1 + $0x4] sm:$0xf]
  %v42 = vld [vmem:[%s1 + $0x8] sm:$0xf]
  %v43 = vld [vmem:[%s1 + $0xc] sm:$0xf]
  %v44 = vld [vmem:[%s1 + $0x10] sm:$0xf]
  %v45 = vld [vmem:[%s1 + $0x14] sm:$0xf]
  %v46 = vld [vmem:[%s1 + $0x18] sm:$0xf]
  %v47 = vld [vmem:[%s1 + $0x1c] sm:$0xf]
  %v64 = vunpack.c.l.b16 %v24
  %v65 = vunpack.c.l.b16 %v25
  %v66 = vunpack.c.l.b16 %v26
  %v67 = vunpack.c.l.b16 %v27
  %v68 = vunpack.c.l.b16 %v28
  %v69 = vunpack.c.l.b16 %v29
  %v70 = vunpack.c.l.b16 %v30
  %v71 = vunpack.c.l.b16 %v31
  %v72 = vunpack.c.l.b16 %v32
  %v73 = vunpack.c.l.b16 %v33
  %v74 = vunpack.c.l.b16 %v34
  %v75 = vunpack.c.l.b16 %v35
  %v76 = vunpack.c.l.b16 %v36
  %v77 = vunpack.c.l.b16 %v37
  %v78 = vunpack.c.l.b16 %v38
  %v79 = vunpack.c.l.b16 %v39
  %v80 = vpack.c.b16 %v65, %v64
  %v81 = vpack.c.b16 %v67, %v66
  %v82 = vpack.c.b16 %v69, %v68
  %v83 = vpack.c.b16 %v71, %v70
  %v84 = vpack.c.b16 %v73, %v72
  %v85 = vpack.c.b16 %v75, %v74
  %v86 = vpack.c.b16 %v77, %v76
  %v87 = vpack.c.b16 %v79, %v78
  %v96 = vunpack.c.l.b16 %v40
  %v97 = vunpack.c.l.b16 %v41
  %v98 = vunpack.c.l.b16 %v42
  %v99 = vunpack.c.l.b16 %v43
  %v100 = vunpack.c.l.b16 %v44
  %v101 = vunpack.c.l.b16 %v45
  %v102 = vunpack.c.l.b16 %v46
  %v103 = vunpack.c.l.b16 %v47
  %v104 = vpack.c.b16 %v97, %v96
  %v105 = vpack.c.b16 %v99, %v98
  %v106 = vpack.c.b16 %v101, %v100
  %v107 = vpack.c.b16 %v103, %v102
  %vm112 = vcmask 523264
  %v114 = vsel %vm112, %v80, 0
  %v117 = vsel %vm112, %v81, 0
  %v120 = vsel %vm112, %v82, 0
  %v123 = vsel %vm112, %v83, 0
  %v126 = vsel %vm112, %v84, 0
  %v129 = vsel %vm112, %v85, 0
  %v132 = vsel %vm112, %v86, 0
  %v135 = vsel %vm112, %v87, 0
  %137 = vmatprep.subr.bf16.mxu0 0
  %138 = vmatpush1.bf16.msra.mxu0 %v104
  %139 = vmatprep.subr.bf16.mxu0 0
  %140 = vmatpush1.bf16.msra.mxu0 %v105
  %141 = vmatprep.subr.bf16.mxu0 0
  %142 = vmatpush1.bf16.msra.mxu0 %v106
  %143 = vmatprep.subr.bf16.mxu0 0
  %144 = vmatpush1.bf16.msra.mxu0 %v107
  %145 = vmatprep.subr.bf16.mxu0 0
  %146 = vmatpush1.bf16.msra.mxu0 0
  %147 = vmatprep.subr.bf16.mxu0 0
  %148 = vmatpush1.bf16.msra.mxu0 0
  %149 = vmatprep.subr.bf16.mxu0 0
  %150 = vmatpush1.bf16.msra.mxu0 0
  %151 = vmatprep.subr.bf16.mxu0 0
  %152 = vmatpush1.bf16.msra.mxu0 0
  %153 = vmatprep.subr.bf16.mxu0 0
  %154 = vmatpush1.bf16.msra.mxu0 0
  %155 = vmatprep.subr.bf16.mxu0 0
  %156 = vmatpush1.bf16.msra.mxu0 0
  %157 = vmatprep.subr.bf16.mxu0 0
  %158 = vmatpush1.bf16.msra.mxu0 0
  %159 = vmatprep.subr.bf16.mxu0 0
  %160 = vmatpush1.bf16.msra.mxu0 0
  %161 = vmatprep.subr.bf16.mxu0 0
  %162 = vmatpush1.bf16.msra.mxu0 0
  %163 = vmatprep.subr.bf16.mxu0 0
  %164 = vmatpush1.bf16.msra.mxu0 0
  %165 = vmatprep.subr.bf16.mxu0 0
  %166 = vmatpush1.bf16.msra.mxu0 0
  %167 = vmatprep.subr.bf16.mxu0 0
  %168 = vmatpush1.bf16.msra.mxu0 0
  %169 = vmatprep.mubr.bf16.mxu0 0
  %170 = vmatmul.mubr.bf16.gmra.mrb[0].mxu0 %v114
  %v171 = vpop.f32.mrb[0].mxu0
  %v172 = vadd.f32 0.0, %v171
  %v173 = vpop.f32.mrb[0].mxu0
  %v174 = vpop.f32.mrb[0].mxu0
  %v175 = vadd.f32 0.0, %v174
  %v176 = vpop.f32.mrb[0].mxu0
  %177 = vmatprep.mubr.bf16.mxu0 0
  %178 = vmatmul.mubr.bf16.gmra.mrb[0].mxu0 %v117
  %v179 = vpop.f32.mrb[0].mxu0
  %v180 = vadd.f32 0.0, %v179
  %v181 = vpop.f32.mrb[0].mxu0
  %v182 = vpop.f32.mrb[0].mxu0
  %v183 = vadd.f32 0.0, %v182
  %v184 = vpop.f32.mrb[0].mxu0
  %185 = vmatprep.mubr.bf16.mxu0 0
  %186 = vmatmul.mubr.bf16.gmra.mrb[0].mxu0 %v120
  %v187 = vpop.f32.mrb[0].mxu0
  %v188 = vadd.f32 0.0, %v187
  %v189 = vpop.f32.mrb[0].mxu0
  %v190 = vpop.f32.mrb[0].mxu0
  %v191 = vadd.f32 0.0, %v190
  %v192 = vpop.f32.mrb[0].mxu0
  %193 = vmatprep.mubr.bf16.mxu0 0
  %194 = vmatmul.mubr.bf16.gmra.mrb[0].mxu0 %v123
  %v195 = vpop.f32.mrb[0].mxu0
  %v196 = vadd.f32 0.0, %v195
  %v197 = vpop.f32.mrb[0].mxu0
  %v198 = vpop.f32.mrb[0].mxu0
  %v199 = vadd.f32 0.0, %v198
  %v200 = vpop.f32.mrb[0].mxu0
  %201 = vmatprep.mubr.bf16.mxu0 0
  %202 = vmatmul.mubr.bf16.gmra.mrb[0].mxu0 %v126
  %v203 = vpop.f32.mrb[0].mxu0
  %v204 = vadd.f32 0.0, %v203
  %v205 = vpop.f32.mrb[0].mxu0
  %v206 = vpop.f32.mrb[0].mxu0
  %v207 = vadd.f32 0.0, %v206
  %v208 = vpop.f32.mrb[0].mxu0
  %209 = vmatprep.mubr.bf16.mxu0 0
  %210 = vmatmul.mubr.bf16.gmra.mrb[0].mxu0 %v129
  %v211 = vpop.f32.mrb[0].mxu0
  %v212 = vadd.f32 0.0, %v211
  %v213 = vpop.f32.mrb[0].mxu0
  %v214 = vpop.f32.mrb[0].mxu0
  %v215 = vadd.f32 0.0, %v214
  %v216 = vpop.f32.mrb[0].mxu0
  %217 = vmatprep.mubr.bf16.mxu0 0
  %218 = vmatmul.mubr.bf16.gmra.mrb[0].mxu0 %v132
  %v219 = vpop.f32.mrb[0].mxu0
  %v220 = vadd.f32 0.0, %v219
  %v221 = vpop.f32.mrb[0].mxu0
  %v222 = vpop.f32.mrb[0].mxu0
  %v223 = vadd.f32 0.0, %v222
  %v224 = vpop.f32.mrb[0].mxu0
  %225 = vmatprep.mubr.bf16.mxu0 0
  %226 = vmatmul.mubr.bf16.gmra.mrb[0].mxu0 %v135
  %v227 = vpop.f32.mrb[0].mxu0
  %v228 = vadd.f32 0.0, %v227
  %v229 = vpop.f32.mrb[0].mxu0
  %v230 = vpop.f32.mrb[0].mxu0
  %v231 = vadd.f32 0.0, %v230
  %v232 = vpop.f32.mrb[0].mxu0
  %233 = vdwg.mxu0
  %v234 = vmul.f32 %v172, 0.2
  %v235 = vmul.f32 %v175, 0.2
  %v236 = vmul.f32 %v180, 0.2
  %v237 = vmul.f32 %v183, 0.2
  %v238 = vmul.f32 %v188, 0.2
  %v239 = vmul.f32 %v191, 0.2
  %v240 = vmul.f32 %v196, 0.2
  %v241 = vmul.f32 %v199, 0.2
  %v242 = vmul.f32 %v204, 0.2
  %v243 = vmul.f32 %v207, 0.2
  %v244 = vmul.f32 %v212, 0.2
  %v245 = vmul.f32 %v215, 0.2
  %v246 = vmul.f32 %v220, 0.2
  %v247 = vmul.f32 %v223, 0.2
  %v248 = vmul.f32 %v228, 0.2
  %v249 = vmul.f32 %v231, 0.2
  %v250 = vmax.f32 %v172, %v234
  %v251 = vmax.f32 %v175, %v235
  %v252 = vmax.f32 %v180, %v236
  %v253 = vmax.f32 %v183, %v237
  %v254 = vmax.f32 %v188, %v238
  %v255 = vmax.f32 %v191, %v239
  %v256 = vmax.f32 %v196, %v240
  %v257 = vmax.f32 %v199, %v241
  %v258 = vmax.f32 %v204, %v242
  %v259 = vmax.f32 %v207, %v243
  %v260 = vmax.f32 %v212, %v244
  %v261 = vmax.f32 %v215, %v245
  %v262 = vmax.f32 %v220, %v246
  %v263 = vmax.f32 %v223, %v247
  %v264 = vmax.f32 %v228, %v248
  %v265 = vmax.f32 %v231, %v249
  %v266 = vpack.c.bf16 %v251, %v250
  %v267 = vpack.c.bf16 %v253, %v252
  %v268 = vpack.c.bf16 %v255, %v254
  %v269 = vpack.c.bf16 %v257, %v256
  %v270 = vpack.c.bf16 %v259, %v258
  %v271 = vpack.c.bf16 %v261, %v260
  %v272 = vpack.c.bf16 %v263, %v262
  %v273 = vpack.c.bf16 %v265, %v264
  %v274 = vld [vmem:[%s2] sm:$0xf]
  %v275 = vld [vmem:[%s2 + $0x4] sm:$0xf]
  %v276 = vld [vmem:[%s2 + $0x8] sm:$0xf]
  %v277 = vld [vmem:[%s2 + $0xc] sm:$0xf]
  %v278 = vld [vmem:[%s2 + $0x10] sm:$0xf]
  %v279 = vld [vmem:[%s2 + $0x14] sm:$0xf]
  %v280 = vld [vmem:[%s2 + $0x18] sm:$0xf]
  %v281 = vld [vmem:[%s2 + $0x1c] sm:$0xf]
  %v282 = vld [vmem:[%s2 + $0x20] sm:$0xf]
  %v283 = vld [vmem:[%s2 + $0x24] sm:$0xf]
  %v284 = vld [vmem:[%s2 + $0x28] sm:$0xf]
  %v285 = vld [vmem:[%s2 + $0x2c] sm:$0xf]
  %v286 = vld [vmem:[%s2 + $0x30] sm:$0xf]
  %v287 = vld [vmem:[%s2 + $0x34] sm:$0xf]
  %v288 = vld [vmem:[%s2 + $0x38] sm:$0xf]
  %v289 = vld [vmem:[%s2 + $0x3c] sm:$0xf]
  %v306 = vunpack.c.l.b16 %v274
  %v307 = vunpack.c.l.b16 %v275
  %v308 = vunpack.c.l.b16 %v276
  %v309 = vunpack.c.l.b16 %v277
  %v310 = vunpack.c.l.b16 %v278
  %v311 = vunpack.c.l.b16 %v279
  %v312 = vunpack.c.l.b16 %v280
  %v313 = vunpack.c.l.b16 %v281
  %v314 = vunpack.c.l.b16 %v282
  %v315 = vunpack.c.l.b16 %v283
  %v316 = vunpack.c.l.b16 %v284
  %v317 = vunpack.c.l.b16 %v285
  %v318 = vunpack.c.l.b16 %v286
  %v319 = vunpack.c.l.b16 %v287
  %v320 = vunpack.c.l.b16 %v288
  %v321 = vunpack.c.l.b16 %v289
  %v322 = vpack.c.b16 %v307, %v306
  %v323 = vpack.c.b16 %v309, %v308
  %v324 = vpack.c.b16 %v311, %v310
  %v325 = vpack.c.b16 %v313, %v312
  %v326 = vpack.c.b16 %v315, %v314
  %v327 = vpack.c.b16 %v317, %v316
  %v328 = vpack.c.b16 %v319, %v318
  %v329 = vpack.c.b16 %v321, %v320
  %338 = vmatprep.subr.bf16.mxu0 0
  %339 = vmatpush1.bf16.msra.mxu0 %v266
  %340 = vmatprep.subr.bf16.mxu0 0
  %341 = vmatpush1.bf16.msra.mxu0 %v267
  %342 = vmatprep.subr.bf16.mxu0 0
  %343 = vmatpush1.bf16.msra.mxu0 %v268
  %344 = vmatprep.subr.bf16.mxu0 0
  %345 = vmatpush1.bf16.msra.mxu0 %v269
  %346 = vmatprep.subr.bf16.mxu0 0
  %347 = vmatpush1.bf16.msra.mxu0 %v270
  %348 = vmatprep.subr.bf16.mxu0 0
  %349 = vmatpush1.bf16.msra.mxu0 %v271
  %350 = vmatprep.subr.bf16.mxu0 0
  %351 = vmatpush1.bf16.msra.mxu0 %v272
  %352 = vmatprep.subr.bf16.mxu0 0
  %353 = vmatpush1.bf16.msra.mxu0 %v273
  %354 = vmatprep.subr.bf16.mxu0 0
  %355 = vmatpush1.bf16.msra.mxu0 0
  %356 = vmatprep.subr.bf16.mxu0 0
  %357 = vmatpush1.bf16.msra.mxu0 0
  %358 = vmatprep.subr.bf16.mxu0 0
  %359 = vmatpush1.bf16.msra.mxu0 0
  %360 = vmatprep.subr.bf16.mxu0 0
  %361 = vmatpush1.bf16.msra.mxu0 0
  %362 = vmatprep.subr.bf16.mxu0 0
  %363 = vmatpush1.bf16.msra.mxu0 0
  %364 = vmatprep.subr.bf16.mxu0 0
  %365 = vmatpush1.bf16.msra.mxu0 0
  %366 = vmatprep.subr.bf16.mxu0 0
  %367 = vmatpush1.bf16.msra.mxu0 0
  %368 = vmatprep.subr.bf16.mxu0 0
  %369 = vmatpush1.bf16.msra.mxu0 0
  %370 = vmatprep.mubr.bf16.mxu0 0
  %371 = vmatmul.mubr.bf16.gmra.mrb[0].mxu0 %v322
  %v372 = vpop.f32.mrb[0].mxu0
  %v373 = vadd.f32 0.0, %v372
  %v374 = vpop.f32.mrb[0].mxu0
  %v375 = vpop.f32.mrb[0].mxu0
  %v376 = vadd.f32 0.0, %v375
  %v377 = vpop.f32.mrb[0].mxu0
  %378 = vmatprep.mubr.bf16.mxu0 0
  %379 = vmatmul.mubr.bf16.gmra.mrb[0].mxu0 %v323
  %v380 = vpop.f32.mrb[0].mxu0
  %v381 = vadd.f32 0.0, %v380
  %v382 = vpop.f32.mrb[0].mxu0
  %v383 = vpop.f32.mrb[0].mxu0
  %v384 = vadd.f32 0.0, %v383
  %v385 = vpop.f32.mrb[0].mxu0
  %386 = vmatprep.mubr.bf16.mxu0 0
  %387 = vmatmul.mubr.bf16.gmra.mrb[0].mxu0 %v324
  %v388 = vpop.f32.mrb[0].mxu0
  %v389 = vadd.f32 0.0, %v388
  %v390 = vpop.f32.mrb[0].mxu0
  %v391 = vpop.f32.mrb[0].mxu0
  %v392 = vadd.f32 0.0, %v391
  %v393 = vpop.f32.mrb[0].mxu0
  %394 = vmatprep.mubr.bf16.mxu0 0
  %395 = vmatmul.mubr.bf16.gmra.mrb[0].mxu0 %v325
  %v396 = vpop.f32.mrb[0].mxu0
  %v397 = vadd.f32 0.0, %v396
  %v398 = vpop.f32.mrb[0].mxu0
  %v399 = vpop.f32.mrb[0].mxu0
  %v400 = vadd.f32 0.0, %v399
  %v401 = vpop.f32.mrb[0].mxu0
  %402 = vmatprep.mubr.bf16.mxu0 0
  %403 = vmatmul.mubr.bf16.gmra.mrb[0].mxu0 %v326
  %v404 = vpop.f32.mrb[0].mxu0
  %v405 = vadd.f32 0.0, %v404
  %v406 = vpop.f32.mrb[0].mxu0
  %v407 = vpop.f32.mrb[0].mxu0
  %v408 = vadd.f32 0.0, %v407
  %v409 = vpop.f32.mrb[0].mxu0
  %410 = vmatprep.mubr.bf16.mxu0 0
  %411 = vmatmul.mubr.bf16.gmra.mrb[0].mxu0 %v327
  %v412 = vpop.f32.mrb[0].mxu0
  %v413 = vadd.f32 0.0, %v412
  %v414 = vpop.f32.mrb[0].mxu0
  %v415 = vpop.f32.mrb[0].mxu0
  %v416 = vadd.f32 0.0, %v415
  %v417 = vpop.f32.mrb[0].mxu0
  %418 = vmatprep.mubr.bf16.mxu0 0
  %419 = vmatmul.mubr.bf16.gmra.mrb[0].mxu0 %v328
  %v420 = vpop.f32.mrb[0].mxu0
  %v421 = vadd.f32 0.0, %v420
  %v422 = vpop.f32.mrb[0].mxu0
  %v423 = vpop.f32.mrb[0].mxu0
  %v424 = vadd.f32 0.0, %v423
  %v425 = vpop.f32.mrb[0].mxu0
  %426 = vmatprep.mubr.bf16.mxu0 0
  %427 = vmatmul.mubr.bf16.gmra.mrb[0].mxu0 %v329
  %v428 = vpop.f32.mrb[0].mxu0
  %v429 = vadd.f32 0.0, %v428
  %v430 = vpop.f32.mrb[0].mxu0
  %v431 = vpop.f32.mrb[0].mxu0
  %v432 = vadd.f32 0.0, %v431
  %v433 = vpop.f32.mrb[0].mxu0
  %434 = vdwg.mxu0
  %v435 = vpack.c.bf16 %v376, %v373
  %v436 = vpack.c.bf16 %v384, %v381
  %v437 = vpack.c.bf16 %v392, %v389
  %v438 = vpack.c.bf16 %v400, %v397
  %v439 = vpack.c.bf16 %v408, %v405
  %v440 = vpack.c.bf16 %v416, %v413
  %v441 = vpack.c.bf16 %v424, %v421
  %v442 = vpack.c.bf16 %v432, %v429
  %v443 = vld [vmem:[%s3] sm:$0xff]
  %v444 = vpack.c.bf16 %v443, %v443
  %v445 = vld [vmem:[%s3 + $0x8] sm:$0xff]
  %v446 = vpack.c.bf16 %v445, %v445
  %vm447 = vcmask 64512
  %v449 = vsel %vm447, %v437, 0
  %v452 = vsel %vm447, %v438, 0
  %vm454 = vcmask 1043456
  %v456 = vsel %vm454, %v446, 0
  %458 = vmatprep.subr.bf16.mxu0 0
  %459 = vmatpush1.bf16.msra.mxu0 %v456
  %460 = vmatprep.subr.bf16.mxu0 0
  %461 = vmatpush1.bf16.msra.mxu0 0
  %462 = vmatprep.subr.bf16.mxu0 0
  %463 = vmatpush1.bf16.msra.mxu0 0
  %464 = vmatprep.subr.bf16.mxu0 0
  %465 = vmatpush1.bf16.msra.mxu0 0
  %466 = vmatprep.subr.bf16.mxu0 0
  %467 = vmatpush1.bf16.msra.mxu0 0
  %468 = vmatprep.subr.bf16.mxu0 0
  %469 = vmatpush1.bf16.msra.mxu0 0
  %470 = vmatprep.subr.bf16.mxu0 0
  %471 = vmatpush1.bf16.msra.mxu0 0
  %472 = vmatprep.subr.bf16.mxu0 0
  %473 = vmatpush1.bf16.msra.mxu0 0
  %474 = vmatprep.subr.bf16.mxu0 0
  %475 = vmatpush1.bf16.msra.mxu0 0
  %476 = vmatprep.subr.bf16.mxu0 0
  %477 = vmatpush1.bf16.msra.mxu0 0
  %478 = vmatprep.subr.bf16.mxu0 0
  %479 = vmatpush1.bf16.msra.mxu0 0
  %480 = vmatprep.subr.bf16.mxu0 0
  %481 = vmatpush1.bf16.msra.mxu0 0
  %482 = vmatprep.subr.bf16.mxu0 0
  %483 = vmatpush1.bf16.msra.mxu0 0
  %484 = vmatprep.subr.bf16.mxu0 0
  %485 = vmatpush1.bf16.msra.mxu0 0
  %486 = vmatprep.subr.bf16.mxu0 0
  %487 = vmatpush1.bf16.msra.mxu0 0
  %488 = vmatprep.subr.bf16.mxu0 0
  %489 = vmatpush1.bf16.msra.mxu0 0
  %490 = vmatprep.mubr.bf16.mxu0 0
  %491 = vmatmul.mubr.bf16.gmra.mrb[0].mxu0 %v449
  %v492 = vpop.f32.mrb[0].mxu0
  %v493 = vadd.f32 0.0, %v492
  %v494 = vpop.f32.mrb[0].mxu0
  %v495 = vpop.f32.mrb[0].mxu0
  %v496 = vadd.f32 0.0, %v495
  %v497 = vpop.f32.mrb[0].mxu0
  %498 = vmatprep.mubr.bf16.mxu0 0
  %499 = vmatmul.mubr.bf16.gmra.mrb[0].mxu0 %v452
  %v500 = vpop.f32.mrb[0].mxu0
  %v501 = vadd.f32 0.0, %v500
  %v502 = vpop.f32.mrb[0].mxu0
  %v503 = vpop.f32.mrb[0].mxu0
  %v504 = vadd.f32 0.0, %v503
  %v505 = vpop.f32.mrb[0].mxu0
  %506 = vdwg.mxu0
  %v508 = vsel %vm447, %v435, 0
  %v511 = vsel %vm447, %v436, 0
  %v514 = vsel %vm454, %v444, 0
  %516 = vmatprep.subr.bf16.mxu0 0
  %517 = vmatpush1.bf16.msra.mxu0 %v514
  %518 = vmatprep.subr.bf16.mxu0 0
  %519 = vmatpush1.bf16.msra.mxu0 0
  %520 = vmatprep.subr.bf16.mxu0 0
  %521 = vmatpush1.bf16.msra.mxu0 0
  %522 = vmatprep.subr.bf16.mxu0 0
  %523 = vmatpush1.bf16.msra.mxu0 0
  %524 = vmatprep.subr.bf16.mxu0 0
  %525 = vmatpush1.bf16.msra.mxu0 0
  %526 = vmatprep.subr.bf16.mxu0 0
  %527 = vmatpush1.bf16.msra.mxu0 0
  %528 = vmatprep.subr.bf16.mxu0 0
  %529 = vmatpush1.bf16.msra.mxu0 0
  %530 = vmatprep.subr.bf16.mxu0 0
  %531 = vmatpush1.bf16.msra.mxu0 0
  %532 = vmatprep.subr.bf16.mxu0 0
  %533 = vmatpush1.bf16.msra.mxu0 0
  %534 = vmatprep.subr.bf16.mxu0 0
  %535 = vmatpush1.bf16.msra.mxu0 0
  %536 = vmatprep.subr.bf16.mxu0 0
  %537 = vmatpush1.bf16.msra.mxu0 0
  %538 = vmatprep.subr.bf16.mxu0 0
  %539 = vmatpush1.bf16.msra.mxu0 0
  %540 = vmatprep.subr.bf16.mxu0 0
  %541 = vmatpush1.bf16.msra.mxu0 0
  %542 = vmatprep.subr.bf16.mxu0 0
  %543 = vmatpush1.bf16.msra.mxu0 0
  %544 = vmatprep.subr.bf16.mxu0 0
  %545 = vmatpush1.bf16.msra.mxu0 0
  %546 = vmatprep.subr.bf16.mxu0 0
  %547 = vmatpush1.bf16.msra.mxu0 0
  %548 = vmatprep.mubr.bf16.mxu0 0
  %549 = vmatmul.mubr.bf16.gmra.mrb[0].mxu0 %v508
  %v550 = vpop.f32.mrb[0].mxu0
  %v551 = vadd.f32 %v493, %v550
  %v552 = vpop.f32.mrb[0].mxu0
  %v553 = vpop.f32.mrb[0].mxu0
  %v554 = vadd.f32 %v496, %v553
  %v555 = vpop.f32.mrb[0].mxu0
  %556 = vmatprep.mubr.bf16.mxu0 0
  %557 = vmatmul.mubr.bf16.gmra.mrb[0].mxu0 %v511
  %v558 = vpop.f32.mrb[0].mxu0
  %v559 = vadd.f32 %v501, %v558
  %v560 = vpop.f32.mrb[0].mxu0
  %v561 = vpop.f32.mrb[0].mxu0
  %v562 = vadd.f32 %v504, %v561
  %v563 = vpop.f32.mrb[0].mxu0
  %564 = vdwg.mxu0
  %v565 = vld [vmem:[%s3 + $0x10] sm:$0xff]
  %v566 = vpack.c.bf16 %v565, %v565
  %v568 = vsel %vm447, %v439, 0
  %v571 = vsel %vm447, %v440, 0
  %v574 = vsel %vm454, %v566, 0
  %576 = vmatprep.subr.bf16.mxu0 0
  %577 = vmatpush1.bf16.msra.mxu0 %v574
  %578 = vmatprep.subr.bf16.mxu0 0
  %579 = vmatpush1.bf16.msra.mxu0 0
  %580 = vmatprep.subr.bf16.mxu0 0
  %581 = vmatpush1.bf16.msra.mxu0 0
  %582 = vmatprep.subr.bf16.mxu0 0
  %583 = vmatpush1.bf16.msra.mxu0 0
  %584 = vmatprep.subr.bf16.mxu0 0
  %585 = vmatpush1.bf16.msra.mxu0 0
  %586 = vmatprep.subr.bf16.mxu0 0
  %587 = vmatpush1.bf16.msra.mxu0 0
  %588 = vmatprep.subr.bf16.mxu0 0
  %589 = vmatpush1.bf16.msra.mxu0 0
  %590 = vmatprep.subr.bf16.mxu0 0
  %591 = vmatpush1.bf16.msra.mxu0 0
  %592 = vmatprep.subr.bf16.mxu0 0
  %593 = vmatpush1.bf16.msra.mxu0 0
  %594 = vmatprep.subr.bf16.mxu0 0
  %595 = vmatpush1.bf16.msra.mxu0 0
  %596 = vmatprep.subr.bf16.mxu0 0
  %597 = vmatpush1.bf16.msra.mxu0 0
  %598 = vmatprep.subr.bf16.mxu0 0
  %599 = vmatpush1.bf16.msra.mxu0 0
  %600 = vmatprep.subr.bf16.mxu0 0
  %601 = vmatpush1.bf16.msra.mxu0 0
  %602 = vmatprep.subr.bf16.mxu0 0
  %603 = vmatpush1.bf16.msra.mxu0 0
  %604 = vmatprep.subr.bf16.mxu0 0
  %605 = vmatpush1.bf16.msra.mxu0 0
  %606 = vmatprep.subr.bf16.mxu0 0
  %607 = vmatpush1.bf16.msra.mxu0 0
  %608 = vmatprep.mubr.bf16.mxu0 0
  %609 = vmatmul.mubr.bf16.gmra.mrb[0].mxu0 %v568
  %v610 = vpop.f32.mrb[0].mxu0
  %v611 = vadd.f32 0.0, %v610
  %v612 = vpop.f32.mrb[0].mxu0
  %v613 = vpop.f32.mrb[0].mxu0
  %v614 = vadd.f32 0.0, %v613
  %v615 = vpop.f32.mrb[0].mxu0
  %616 = vmatprep.mubr.bf16.mxu0 0
  %617 = vmatmul.mubr.bf16.gmra.mrb[0].mxu0 %v571
  %v618 = vpop.f32.mrb[0].mxu0
  %v619 = vadd.f32 0.0, %v618
  %v620 = vpop.f32.mrb[0].mxu0
  %v621 = vpop.f32.mrb[0].mxu0
  %v622 = vadd.f32 0.0, %v621
  %v623 = vpop.f32.mrb[0].mxu0
  %624 = vdwg.mxu0
  %v625 = vadd.f32 %v551, %v611
  %v626 = vadd.f32 %v554, %v614
  %v627 = vadd.f32 %v559, %v619
  %v628 = vadd.f32 %v562, %v622
  %v629 = vld [vmem:[%s3 + $0x18] sm:$0xff]
  %v630 = vpack.c.bf16 %v629, %v629
  %v632 = vsel %vm447, %v441, 0
  %v635 = vsel %vm447, %v442, 0
  %v638 = vsel %vm454, %v630, 0
  %640 = vmatprep.subr.bf16.mxu0 0
  %641 = vmatpush1.bf16.msra.mxu0 %v638
  %642 = vmatprep.subr.bf16.mxu0 0
  %643 = vmatpush1.bf16.msra.mxu0 0
  %644 = vmatprep.subr.bf16.mxu0 0
  %645 = vmatpush1.bf16.msra.mxu0 0
  %646 = vmatprep.subr.bf16.mxu0 0
  %647 = vmatpush1.bf16.msra.mxu0 0
  %648 = vmatprep.subr.bf16.mxu0 0
  %649 = vmatpush1.bf16.msra.mxu0 0
  %650 = vmatprep.subr.bf16.mxu0 0
  %651 = vmatpush1.bf16.msra.mxu0 0
  %652 = vmatprep.subr.bf16.mxu0 0
  %653 = vmatpush1.bf16.msra.mxu0 0
  %654 = vmatprep.subr.bf16.mxu0 0
  %655 = vmatpush1.bf16.msra.mxu0 0
  %656 = vmatprep.subr.bf16.mxu0 0
  %657 = vmatpush1.bf16.msra.mxu0 0
  %658 = vmatprep.subr.bf16.mxu0 0
  %659 = vmatpush1.bf16.msra.mxu0 0
  %660 = vmatprep.subr.bf16.mxu0 0
  %661 = vmatpush1.bf16.msra.mxu0 0
  %662 = vmatprep.subr.bf16.mxu0 0
  %663 = vmatpush1.bf16.msra.mxu0 0
  %664 = vmatprep.subr.bf16.mxu0 0
  %665 = vmatpush1.bf16.msra.mxu0 0
  %666 = vmatprep.subr.bf16.mxu0 0
  %667 = vmatpush1.bf16.msra.mxu0 0
  %668 = vmatprep.subr.bf16.mxu0 0
  %669 = vmatpush1.bf16.msra.mxu0 0
  %670 = vmatprep.subr.bf16.mxu0 0
  %671 = vmatpush1.bf16.msra.mxu0 0
  %672 = vmatprep.mubr.bf16.mxu0 0
  %673 = vmatmul.mubr.bf16.gmra.mrb[0].mxu0 %v632
  %v674 = vpop.f32.mrb[0].mxu0
  %v675 = vadd.f32 0.0, %v674
  %v676 = vpop.f32.mrb[0].mxu0
  %v677 = vpop.f32.mrb[0].mxu0
  %v678 = vadd.f32 0.0, %v677
  %v679 = vpop.f32.mrb[0].mxu0
  %680 = vmatprep.mubr.bf16.mxu0 0
  %681 = vmatmul.mubr.bf16.gmra.mrb[0].mxu0 %v635
  %v682 = vpop.f32.mrb[0].mxu0
  %v683 = vadd.f32 0.0, %v682
  %v684 = vpop.f32.mrb[0].mxu0
  %v685 = vpop.f32.mrb[0].mxu0
  %v686 = vadd.f32 0.0, %v685
  %v687 = vpop.f32.mrb[0].mxu0
  %688 = vdwg.mxu0
  %v689 = vadd.f32 %v625, %v675
  %v690 = vadd.f32 %v626, %v678
  %v691 = vadd.f32 %v627, %v683
  %v692 = vadd.f32 %v628, %v686
  %v693 = vld [vmem:[%s2 + $0x40] sm:$0xf]
  %v694 = vld [vmem:[%s2 + $0x44] sm:$0xf]
  %v695 = vld [vmem:[%s2 + $0x48] sm:$0xf]
  %v696 = vld [vmem:[%s2 + $0x4c] sm:$0xf]
  %v697 = vld [vmem:[%s2 + $0x50] sm:$0xf]
  %v698 = vld [vmem:[%s2 + $0x54] sm:$0xf]
  %v699 = vld [vmem:[%s2 + $0x58] sm:$0xf]
  %v700 = vld [vmem:[%s2 + $0x5c] sm:$0xf]
  %v701 = vld [vmem:[%s2 + $0x60] sm:$0xf]
  %v702 = vld [vmem:[%s2 + $0x64] sm:$0xf]
  %v703 = vld [vmem:[%s2 + $0x68] sm:$0xf]
  %v704 = vld [vmem:[%s2 + $0x6c] sm:$0xf]
  %v705 = vld [vmem:[%s2 + $0x70] sm:$0xf]
  %v706 = vld [vmem:[%s2 + $0x74] sm:$0xf]
  %v707 = vld [vmem:[%s2 + $0x78] sm:$0xf]
  %v708 = vld [vmem:[%s2 + $0x7c] sm:$0xf]
  %v725 = vunpack.c.l.b16 %v693
  %v726 = vunpack.c.l.b16 %v694
  %v727 = vunpack.c.l.b16 %v695
  %v728 = vunpack.c.l.b16 %v696
  %v729 = vunpack.c.l.b16 %v697
  %v730 = vunpack.c.l.b16 %v698
  %v731 = vunpack.c.l.b16 %v699
  %v732 = vunpack.c.l.b16 %v700
  %v733 = vunpack.c.l.b16 %v701
  %v734 = vunpack.c.l.b16 %v702
  %v735 = vunpack.c.l.b16 %v703
  %v736 = vunpack.c.l.b16 %v704
  %v737 = vunpack.c.l.b16 %v705
  %v738 = vunpack.c.l.b16 %v706
  %v739 = vunpack.c.l.b16 %v707
  %v740 = vunpack.c.l.b16 %v708
  %v741 = vpack.c.b16 %v726, %v725
  %v742 = vpack.c.b16 %v728, %v727
  %v743 = vpack.c.b16 %v730, %v729
  %v744 = vpack.c.b16 %v732, %v731
  %v745 = vpack.c.b16 %v734, %v733
  %v746 = vpack.c.b16 %v736, %v735
  %v747 = vpack.c.b16 %v738, %v737
  %v748 = vpack.c.b16 %v740, %v739
  %757 = vmatprep.subr.bf16.mxu0 0
  %758 = vmatpush1.bf16.msra.mxu0 %v266
  %759 = vmatprep.subr.bf16.mxu0 0
  %760 = vmatpush1.bf16.msra.mxu0 %v267
  %761 = vmatprep.subr.bf16.mxu0 0
  %762 = vmatpush1.bf16.msra.mxu0 %v268
  %763 = vmatprep.subr.bf16.mxu0 0
  %764 = vmatpush1.bf16.msra.mxu0 %v269
  %765 = vmatprep.subr.bf16.mxu0 0
  %766 = vmatpush1.bf16.msra.mxu0 %v270
  %767 = vmatprep.subr.bf16.mxu0 0
  %768 = vmatpush1.bf16.msra.mxu0 %v271
  %769 = vmatprep.subr.bf16.mxu0 0
  %770 = vmatpush1.bf16.msra.mxu0 %v272
  %771 = vmatprep.subr.bf16.mxu0 0
  %772 = vmatpush1.bf16.msra.mxu0 %v273
  %773 = vmatprep.subr.bf16.mxu0 0
  %774 = vmatpush1.bf16.msra.mxu0 0
  %775 = vmatprep.subr.bf16.mxu0 0
  %776 = vmatpush1.bf16.msra.mxu0 0
  %777 = vmatprep.subr.bf16.mxu0 0
  %778 = vmatpush1.bf16.msra.mxu0 0
  %779 = vmatprep.subr.bf16.mxu0 0
  %780 = vmatpush1.bf16.msra.mxu0 0
  %781 = vmatprep.subr.bf16.mxu0 0
  %782 = vmatpush1.bf16.msra.mxu0 0
  %783 = vmatprep.subr.bf16.mxu0 0
  %784 = vmatpush1.bf16.msra.mxu0 0
  %785 = vmatprep.subr.bf16.mxu0 0
  %786 = vmatpush1.bf16.msra.mxu0 0
  %787 = vmatprep.subr.bf16.mxu0 0
  %788 = vmatpush1.bf16.msra.mxu0 0
  %789 = vmatprep.mubr.bf16.mxu0 0
  %790 = vmatmul.mubr.bf16.gmra.mrb[0].mxu0 %v741
  %v791 = vpop.f32.mrb[0].mxu0
  %v792 = vadd.f32 0.0, %v791
  %v793 = vpop.f32.mrb[0].mxu0
  %v794 = vpop.f32.mrb[0].mxu0
  %v795 = vadd.f32 0.0, %v794
  %v796 = vpop.f32.mrb[0].mxu0
  %797 = vmatprep.mubr.bf16.mxu0 0
  %798 = vmatmul.mubr.bf16.gmra.mrb[0].mxu0 %v742
  %v799 = vpop.f32.mrb[0].mxu0
  %v800 = vadd.f32 0.0, %v799
  %v801 = vpop.f32.mrb[0].mxu0
  %v802 = vpop.f32.mrb[0].mxu0
  %v803 = vadd.f32 0.0, %v802
  %v804 = vpop.f32.mrb[0].mxu0
  %805 = vmatprep.mubr.bf16.mxu0 0
  %806 = vmatmul.mubr.bf16.gmra.mrb[0].mxu0 %v743
  %v807 = vpop.f32.mrb[0].mxu0
  %v808 = vadd.f32 0.0, %v807
  %v809 = vpop.f32.mrb[0].mxu0
  %v810 = vpop.f32.mrb[0].mxu0
  %v811 = vadd.f32 0.0, %v810
  %v812 = vpop.f32.mrb[0].mxu0
  %813 = vmatprep.mubr.bf16.mxu0 0
  %814 = vmatmul.mubr.bf16.gmra.mrb[0].mxu0 %v744
  %v815 = vpop.f32.mrb[0].mxu0
  %v816 = vadd.f32 0.0, %v815
  %v817 = vpop.f32.mrb[0].mxu0
  %v818 = vpop.f32.mrb[0].mxu0
  %v819 = vadd.f32 0.0, %v818
  %v820 = vpop.f32.mrb[0].mxu0
  %821 = vmatprep.mubr.bf16.mxu0 0
  %822 = vmatmul.mubr.bf16.gmra.mrb[0].mxu0 %v745
  %v823 = vpop.f32.mrb[0].mxu0
  %v824 = vadd.f32 0.0, %v823
  %v825 = vpop.f32.mrb[0].mxu0
  %v826 = vpop.f32.mrb[0].mxu0
  %v827 = vadd.f32 0.0, %v826
  %v828 = vpop.f32.mrb[0].mxu0
  %829 = vmatprep.mubr.bf16.mxu0 0
  %830 = vmatmul.mubr.bf16.gmra.mrb[0].mxu0 %v746
  %v831 = vpop.f32.mrb[0].mxu0
  %v832 = vadd.f32 0.0, %v831
  %v833 = vpop.f32.mrb[0].mxu0
  %v834 = vpop.f32.mrb[0].mxu0
  %v835 = vadd.f32 0.0, %v834
  %v836 = vpop.f32.mrb[0].mxu0
  %837 = vmatprep.mubr.bf16.mxu0 0
  %838 = vmatmul.mubr.bf16.gmra.mrb[0].mxu0 %v747
  %v839 = vpop.f32.mrb[0].mxu0
  %v840 = vadd.f32 0.0, %v839
  %v841 = vpop.f32.mrb[0].mxu0
  %v842 = vpop.f32.mrb[0].mxu0
  %v843 = vadd.f32 0.0, %v842
  %v844 = vpop.f32.mrb[0].mxu0
  %845 = vmatprep.mubr.bf16.mxu0 0
  %846 = vmatmul.mubr.bf16.gmra.mrb[0].mxu0 %v748
  %v847 = vpop.f32.mrb[0].mxu0
  %v848 = vadd.f32 0.0, %v847
  %v849 = vpop.f32.mrb[0].mxu0
  %v850 = vpop.f32.mrb[0].mxu0
  %v851 = vadd.f32 0.0, %v850
  %v852 = vpop.f32.mrb[0].mxu0
  %853 = vdwg.mxu0
  %v854 = vpack.c.bf16 %v795, %v792
  %v855 = vpack.c.bf16 %v803, %v800
  %v856 = vpack.c.bf16 %v811, %v808
  %v857 = vpack.c.bf16 %v819, %v816
  %v858 = vpack.c.bf16 %v827, %v824
  %v859 = vpack.c.bf16 %v835, %v832
  %v860 = vpack.c.bf16 %v843, %v840
  %v861 = vpack.c.bf16 %v851, %v848
  %v862 = vld [vmem:[%s3 + $0x20] sm:$0xff]
  %v863 = vpack.c.bf16 %v862, %v862
  %v865 = vsel %vm447, %v854, 0
  %v868 = vsel %vm447, %v855, 0
  %v871 = vsel %vm454, %v863, 0
  %873 = vmatprep.subr.bf16.mxu0 0
  %874 = vmatpush1.bf16.msra.mxu0 %v871
  %875 = vmatprep.subr.bf16.mxu0 0
  %876 = vmatpush1.bf16.msra.mxu0 0
  %877 = vmatprep.subr.bf16.mxu0 0
  %878 = vmatpush1.bf16.msra.mxu0 0
  %879 = vmatprep.subr.bf16.mxu0 0
  %880 = vmatpush1.bf16.msra.mxu0 0
  %881 = vmatprep.subr.bf16.mxu0 0
  %882 = vmatpush1.bf16.msra.mxu0 0
  %883 = vmatprep.subr.bf16.mxu0 0
  %884 = vmatpush1.bf16.msra.mxu0 0
  %885 = vmatprep.subr.bf16.mxu0 0
  %886 = vmatpush1.bf16.msra.mxu0 0
  %887 = vmatprep.subr.bf16.mxu0 0
  %888 = vmatpush1.bf16.msra.mxu0 0
  %889 = vmatprep.subr.bf16.mxu0 0
  %890 = vmatpush1.bf16.msra.mxu0 0
  %891 = vmatprep.subr.bf16.mxu0 0
  %892 = vmatpush1.bf16.msra.mxu0 0
  %893 = vmatprep.subr.bf16.mxu0 0
  %894 = vmatpush1.bf16.msra.mxu0 0
  %895 = vmatprep.subr.bf16.mxu0 0
  %896 = vmatpush1.bf16.msra.mxu0 0
  %897 = vmatprep.subr.bf16.mxu0 0
  %898 = vmatpush1.bf16.msra.mxu0 0
  %899 = vmatprep.subr.bf16.mxu0 0
  %900 = vmatpush1.bf16.msra.mxu0 0
  %901 = vmatprep.subr.bf16.mxu0 0
  %902 = vmatpush1.bf16.msra.mxu0 0
  %903 = vmatprep.subr.bf16.mxu0 0
  %904 = vmatpush1.bf16.msra.mxu0 0
  %905 = vmatprep.mubr.bf16.mxu0 0
  %906 = vmatmul.mubr.bf16.gmra.mrb[0].mxu0 %v865
  %v907 = vpop.f32.mrb[0].mxu0
  %v908 = vadd.f32 0.0, %v907
  %v909 = vpop.f32.mrb[0].mxu0
  %v910 = vpop.f32.mrb[0].mxu0
  %v911 = vadd.f32 0.0, %v910
  %v912 = vpop.f32.mrb[0].mxu0
  %913 = vmatprep.mubr.bf16.mxu0 0
  %914 = vmatmul.mubr.bf16.gmra.mrb[0].mxu0 %v868
  %v915 = vpop.f32.mrb[0].mxu0
  %v916 = vadd.f32 0.0, %v915
  %v917 = vpop.f32.mrb[0].mxu0
  %v918 = vpop.f32.mrb[0].mxu0
  %v919 = vadd.f32 0.0, %v918
  %v920 = vpop.f32.mrb[0].mxu0
  %921 = vdwg.mxu0
  %v922 = vadd.f32 %v689, %v908
  %v923 = vadd.f32 %v690, %v911
  %v924 = vadd.f32 %v691, %v916
  %v925 = vadd.f32 %v692, %v919
  %v926 = vld [vmem:[%s3 + $0x28] sm:$0xff]
  %v927 = vpack.c.bf16 %v926, %v926
  %v929 = vsel %vm447, %v856, 0
  %v932 = vsel %vm447, %v857, 0
  %v935 = vsel %vm454, %v927, 0
  %937 = vmatprep.subr.bf16.mxu0 0
  %938 = vmatpush1.bf16.msra.mxu0 %v935
  %939 = vmatprep.subr.bf16.mxu0 0
  %940 = vmatpush1.bf16.msra.mxu0 0
  %941 = vmatprep.subr.bf16.mxu0 0
  %942 = vmatpush1.bf16.msra.mxu0 0
  %943 = vmatprep.subr.bf16.mxu0 0
  %944 = vmatpush1.bf16.msra.mxu0 0
  %945 = vmatprep.subr.bf16.mxu0 0
  %946 = vmatpush1.bf16.msra.mxu0 0
  %947 = vmatprep.subr.bf16.mxu0 0
  %948 = vmatpush1.bf16.msra.mxu0 0
  %949 = vmatprep.subr.bf16.mxu0 0
  %950 = vmatpush1.bf16.msra.mxu0 0
  %951 = vmatprep.subr.bf16.mxu0 0
  %952 = vmatpush1.bf16.msra.mxu0 0
  %953 = vmatprep.subr.bf16.mxu0 0
  %954 = vmatpush1.bf16.msra.mxu0 0
  %955 = vmatprep.subr.bf16.mxu0 0
  %956 = vmatpush1.bf16.msra.mxu0 0
  %957 = vmatprep.subr.bf16.mxu0 0
  %958 = vmatpush1.bf16.msra.mxu0 0
  %959 = vmatprep.subr.bf16.mxu0 0
  %960 = vmatpush1.bf16.msra.mxu0 0
  %961 = vmatprep.subr.bf16.mxu0 0
  %962 = vmatpush1.bf16.msra.mxu0 0
  %963 = vmatprep.subr.bf16.mxu0 0
  %964 = vmatpush1.bf16.msra.mxu0 0
  %965 = vmatprep.subr.bf16.mxu0 0
  %966 = vmatpush1.bf16.msra.mxu0 0
  %967 = vmatprep.subr.bf16.mxu0 0
  %968 = vmatpush1.bf16.msra.mxu0 0
  %969 = vmatprep.mubr.bf16.mxu0 0
  %970 = vmatmul.mubr.bf16.gmra.mrb[0].mxu0 %v929
  %v971 = vpop.f32.mrb[0].mxu0
  %v972 = vadd.f32 0.0, %v971
  %v973 = vpop.f32.mrb[0].mxu0
  %v974 = vpop.f32.mrb[0].mxu0
  %v975 = vadd.f32 0.0, %v974
  %v976 = vpop.f32.mrb[0].mxu0
  %977 = vmatprep.mubr.bf16.mxu0 0
  %978 = vmatmul.mubr.bf16.gmra.mrb[0].mxu0 %v932
  %v979 = vpop.f32.mrb[0].mxu0
  %v980 = vadd.f32 0.0, %v979
  %v981 = vpop.f32.mrb[0].mxu0
  %v982 = vpop.f32.mrb[0].mxu0
  %v983 = vadd.f32 0.0, %v982
  %v984 = vpop.f32.mrb[0].mxu0
  %985 = vdwg.mxu0
  %v986 = vadd.f32 %v922, %v972
  %v987 = vadd.f32 %v923, %v975
  %v988 = vadd.f32 %v924, %v980
  %v989 = vadd.f32 %v925, %v983
  %v990 = vld [vmem:[%s3 + $0x30] sm:$0xff]
  %v991 = vpack.c.bf16 %v990, %v990
  %v993 = vsel %vm447, %v858, 0
  %v996 = vsel %vm447, %v859, 0
  %v999 = vsel %vm454, %v991, 0
  %1001 = vmatprep.subr.bf16.mxu0 0
  %1002 = vmatpush1.bf16.msra.mxu0 %v999
  %1003 = vmatprep.subr.bf16.mxu0 0
  %1004 = vmatpush1.bf16.msra.mxu0 0
  %1005 = vmatprep.subr.bf16.mxu0 0
  %1006 = vmatpush1.bf16.msra.mxu0 0
  %1007 = vmatprep.subr.bf16.mxu0 0
  %1008 = vmatpush1.bf16.msra.mxu0 0
  %1009 = vmatprep.subr.bf16.mxu0 0
  %1010 = vmatpush1.bf16.msra.mxu0 0
  %1011 = vmatprep.subr.bf16.mxu0 0
  %1012 = vmatpush1.bf16.msra.mxu0 0
  %1013 = vmatprep.subr.bf16.mxu0 0
  %1014 = vmatpush1.bf16.msra.mxu0 0
  %1015 = vmatprep.subr.bf16.mxu0 0
  %1016 = vmatpush1.bf16.msra.mxu0 0
  %1017 = vmatprep.subr.bf16.mxu0 0
  %1018 = vmatpush1.bf16.msra.mxu0 0
  %1019 = vmatprep.subr.bf16.mxu0 0
  %1020 = vmatpush1.bf16.msra.mxu0 0
  %1021 = vmatprep.subr.bf16.mxu0 0
  %1022 = vmatpush1.bf16.msra.mxu0 0
  %1023 = vmatprep.subr.bf16.mxu0 0
  %1024 = vmatpush1.bf16.msra.mxu0 0
  %1025 = vmatprep.subr.bf16.mxu0 0
  %1026 = vmatpush1.bf16.msra.mxu0 0
  %1027 = vmatprep.subr.bf16.mxu0 0
  %1028 = vmatpush1.bf16.msra.mxu0 0
  %1029 = vmatprep.subr.bf16.mxu0 0
  %1030 = vmatpush1.bf16.msra.mxu0 0
  %1031 = vmatprep.subr.bf16.mxu0 0
  %1032 = vmatpush1.bf16.msra.mxu0 0
  %1033 = vmatprep.mubr.bf16.mxu0 0
  %1034 = vmatmul.mubr.bf16.gmra.mrb[0].mxu0 %v993
  %v1035 = vpop.f32.mrb[0].mxu0
  %v1036 = vadd.f32 0.0, %v1035
  %v1037 = vpop.f32.mrb[0].mxu0
  %v1038 = vpop.f32.mrb[0].mxu0
  %v1039 = vadd.f32 0.0, %v1038
  %v1040 = vpop.f32.mrb[0].mxu0
  %1041 = vmatprep.mubr.bf16.mxu0 0
  %1042 = vmatmul.mubr.bf16.gmra.mrb[0].mxu0 %v996
  %v1043 = vpop.f32.mrb[0].mxu0
  %v1044 = vadd.f32 0.0, %v1043
  %v1045 = vpop.f32.mrb[0].mxu0
  %v1046 = vpop.f32.mrb[0].mxu0
  %v1047 = vadd.f32 0.0, %v1046
  %v1048 = vpop.f32.mrb[0].mxu0
  %1049 = vdwg.mxu0
  %v1050 = vadd.f32 %v986, %v1036
  %v1051 = vadd.f32 %v987, %v1039
  %v1052 = vadd.f32 %v988, %v1044
  %v1053 = vadd.f32 %v989, %v1047
  %v1054 = vld [vmem:[%s3 + $0x38] sm:$0xff]
  %v1055 = vpack.c.bf16 %v1054, %v1054
  %v1057 = vsel %vm447, %v860, 0
  %v1060 = vsel %vm447, %v861, 0
  %v1063 = vsel %vm454, %v1055, 0
  %1065 = vmatprep.subr.bf16.mxu0 0
  %1066 = vmatpush1.bf16.msra.mxu0 %v1063
  %1067 = vmatprep.subr.bf16.mxu0 0
  %1068 = vmatpush1.bf16.msra.mxu0 0
  %1069 = vmatprep.subr.bf16.mxu0 0
  %1070 = vmatpush1.bf16.msra.mxu0 0
  %1071 = vmatprep.subr.bf16.mxu0 0
  %1072 = vmatpush1.bf16.msra.mxu0 0
  %1073 = vmatprep.subr.bf16.mxu0 0
  %1074 = vmatpush1.bf16.msra.mxu0 0
  %1075 = vmatprep.subr.bf16.mxu0 0
  %1076 = vmatpush1.bf16.msra.mxu0 0
  %1077 = vmatprep.subr.bf16.mxu0 0
  %1078 = vmatpush1.bf16.msra.mxu0 0
  %1079 = vmatprep.subr.bf16.mxu0 0
  %1080 = vmatpush1.bf16.msra.mxu0 0
  %1081 = vmatprep.subr.bf16.mxu0 0
  %1082 = vmatpush1.bf16.msra.mxu0 0
  %1083 = vmatprep.subr.bf16.mxu0 0
  %1084 = vmatpush1.bf16.msra.mxu0 0
  %1085 = vmatprep.subr.bf16.mxu0 0
  %1086 = vmatpush1.bf16.msra.mxu0 0
  %1087 = vmatprep.subr.bf16.mxu0 0
  %1088 = vmatpush1.bf16.msra.mxu0 0
  %1089 = vmatprep.subr.bf16.mxu0 0
  %1090 = vmatpush1.bf16.msra.mxu0 0
  %1091 = vmatprep.subr.bf16.mxu0 0
  %1092 = vmatpush1.bf16.msra.mxu0 0
  %1093 = vmatprep.subr.bf16.mxu0 0
  %1094 = vmatpush1.bf16.msra.mxu0 0
  %1095 = vmatprep.subr.bf16.mxu0 0
  %1096 = vmatpush1.bf16.msra.mxu0 0
  %1097 = vmatprep.mubr.bf16.mxu0 0
  %1098 = vmatmul.mubr.bf16.gmra.mrb[0].mxu0 %v1057
  %v1099 = vpop.f32.mrb[0].mxu0
  %v1100 = vadd.f32 0.0, %v1099
  %v1101 = vpop.f32.mrb[0].mxu0
  %v1102 = vpop.f32.mrb[0].mxu0
  %v1103 = vadd.f32 0.0, %v1102
  %v1104 = vpop.f32.mrb[0].mxu0
  %1105 = vmatprep.mubr.bf16.mxu0 0
  %1106 = vmatmul.mubr.bf16.gmra.mrb[0].mxu0 %v1060
  %v1107 = vpop.f32.mrb[0].mxu0
  %v1108 = vadd.f32 0.0, %v1107
  %v1109 = vpop.f32.mrb[0].mxu0
  %v1110 = vpop.f32.mrb[0].mxu0
  %v1111 = vadd.f32 0.0, %v1110
  %v1112 = vpop.f32.mrb[0].mxu0
  %1113 = vdwg.mxu0
  %v1114 = vadd.f32 %v1050, %v1100
  %v1115 = vadd.f32 %v1051, %v1103
  %v1116 = vadd.f32 %v1052, %v1108
  %v1117 = vadd.f32 %v1053, %v1111
  %v1118 = vld [vmem:[%s2 + $0x80] sm:$0xf]
  %v1119 = vld [vmem:[%s2 + $0x84] sm:$0xf]
  %v1120 = vld [vmem:[%s2 + $0x88] sm:$0xf]
  %v1121 = vld [vmem:[%s2 + $0x8c] sm:$0xf]
  %v1122 = vld [vmem:[%s2 + $0x90] sm:$0xf]
  %v1123 = vld [vmem:[%s2 + $0x94] sm:$0xf]
  %v1124 = vld [vmem:[%s2 + $0x98] sm:$0xf]
  %v1125 = vld [vmem:[%s2 + $0x9c] sm:$0xf]
  %v1126 = vld [vmem:[%s2 + $0xa0] sm:$0xf]
  %v1127 = vld [vmem:[%s2 + $0xa4] sm:$0xf]
  %v1128 = vld [vmem:[%s2 + $0xa8] sm:$0xf]
  %v1129 = vld [vmem:[%s2 + $0xac] sm:$0xf]
  %v1130 = vld [vmem:[%s2 + $0xb0] sm:$0xf]
  %v1131 = vld [vmem:[%s2 + $0xb4] sm:$0xf]
  %v1132 = vld [vmem:[%s2 + $0xb8] sm:$0xf]
  %v1133 = vld [vmem:[%s2 + $0xbc] sm:$0xf]
  %v1150 = vunpack.c.l.b16 %v1118
  %v1151 = vunpack.c.l.b16 %v1119
  %v1152 = vunpack.c.l.b16 %v1120
  %v1153 = vunpack.c.l.b16 %v1121
  %v1154 = vunpack.c.l.b16 %v1122
  %v1155 = vunpack.c.l.b16 %v1123
  %v1156 = vunpack.c.l.b16 %v1124
  %v1157 = vunpack.c.l.b16 %v1125
  %v1158 = vunpack.c.l.b16 %v1126
  %v1159 = vunpack.c.l.b16 %v1127
  %v1160 = vunpack.c.l.b16 %v1128
  %v1161 = vunpack.c.l.b16 %v1129
  %v1162 = vunpack.c.l.b16 %v1130
  %v1163 = vunpack.c.l.b16 %v1131
  %v1164 = vunpack.c.l.b16 %v1132
  %v1165 = vunpack.c.l.b16 %v1133
  %v1166 = vpack.c.b16 %v1151, %v1150
  %v1167 = vpack.c.b16 %v1153, %v1152
  %v1168 = vpack.c.b16 %v1155, %v1154
  %v1169 = vpack.c.b16 %v1157, %v1156
  %v1170 = vpack.c.b16 %v1159, %v1158
  %v1171 = vpack.c.b16 %v1161, %v1160
  %v1172 = vpack.c.b16 %v1163, %v1162
  %v1173 = vpack.c.b16 %v1165, %v1164
  %1182 = vmatprep.subr.bf16.mxu0 0
  %1183 = vmatpush1.bf16.msra.mxu0 %v266
  %1184 = vmatprep.subr.bf16.mxu0 0
  %1185 = vmatpush1.bf16.msra.mxu0 %v267
  %1186 = vmatprep.subr.bf16.mxu0 0
  %1187 = vmatpush1.bf16.msra.mxu0 %v268
  %1188 = vmatprep.subr.bf16.mxu0 0
  %1189 = vmatpush1.bf16.msra.mxu0 %v269
  %1190 = vmatprep.subr.bf16.mxu0 0
  %1191 = vmatpush1.bf16.msra.mxu0 %v270
  %1192 = vmatprep.subr.bf16.mxu0 0
  %1193 = vmatpush1.bf16.msra.mxu0 %v271
  %1194 = vmatprep.subr.bf16.mxu0 0
  %1195 = vmatpush1.bf16.msra.mxu0 %v272
  %1196 = vmatprep.subr.bf16.mxu0 0
  %1197 = vmatpush1.bf16.msra.mxu0 %v273
  %1198 = vmatprep.subr.bf16.mxu0 0
  %1199 = vmatpush1.bf16.msra.mxu0 0
  %1200 = vmatprep.subr.bf16.mxu0 0
  %1201 = vmatpush1.bf16.msra.mxu0 0
  %1202 = vmatprep.subr.bf16.mxu0 0
  %1203 = vmatpush1.bf16.msra.mxu0 0
  %1204 = vmatprep.subr.bf16.mxu0 0
  %1205 = vmatpush1.bf16.msra.mxu0 0
  %1206 = vmatprep.subr.bf16.mxu0 0
  %1207 = vmatpush1.bf16.msra.mxu0 0
  %1208 = vmatprep.subr.bf16.mxu0 0
  %1209 = vmatpush1.bf16.msra.mxu0 0
  %1210 = vmatprep.subr.bf16.mxu0 0
  %1211 = vmatpush1.bf16.msra.mxu0 0
  %1212 = vmatprep.subr.bf16.mxu0 0
  %1213 = vmatpush1.bf16.msra.mxu0 0
  %1214 = vmatprep.mubr.bf16.mxu0 0
  %1215 = vmatmul.mubr.bf16.gmra.mrb[0].mxu0 %v1166
  %v1216 = vpop.f32.mrb[0].mxu0
  %v1217 = vadd.f32 0.0, %v1216
  %v1218 = vpop.f32.mrb[0].mxu0
  %v1219 = vpop.f32.mrb[0].mxu0
  %v1220 = vadd.f32 0.0, %v1219
  %v1221 = vpop.f32.mrb[0].mxu0
  %1222 = vmatprep.mubr.bf16.mxu0 0
  %1223 = vmatmul.mubr.bf16.gmra.mrb[0].mxu0 %v1167
  %v1224 = vpop.f32.mrb[0].mxu0
  %v1225 = vadd.f32 0.0, %v1224
  %v1226 = vpop.f32.mrb[0].mxu0
  %v1227 = vpop.f32.mrb[0].mxu0
  %v1228 = vadd.f32 0.0, %v1227
  %v1229 = vpop.f32.mrb[0].mxu0
  %1230 = vmatprep.mubr.bf16.mxu0 0
  %1231 = vmatmul.mubr.bf16.gmra.mrb[0].mxu0 %v1168
  %v1232 = vpop.f32.mrb[0].mxu0
  %v1233 = vadd.f32 0.0, %v1232
  %v1234 = vpop.f32.mrb[0].mxu0
  %v1235 = vpop.f32.mrb[0].mxu0
  %v1236 = vadd.f32 0.0, %v1235
  %v1237 = vpop.f32.mrb[0].mxu0
  %1238 = vmatprep.mubr.bf16.mxu0 0
  %1239 = vmatmul.mubr.bf16.gmra.mrb[0].mxu0 %v1169
  %v1240 = vpop.f32.mrb[0].mxu0
  %v1241 = vadd.f32 0.0, %v1240
  %v1242 = vpop.f32.mrb[0].mxu0
  %v1243 = vpop.f32.mrb[0].mxu0
  %v1244 = vadd.f32 0.0, %v1243
  %v1245 = vpop.f32.mrb[0].mxu0
  %1246 = vmatprep.mubr.bf16.mxu0 0
  %1247 = vmatmul.mubr.bf16.gmra.mrb[0].mxu0 %v1170
  %v1248 = vpop.f32.mrb[0].mxu0
  %v1249 = vadd.f32 0.0, %v1248
  %v1250 = vpop.f32.mrb[0].mxu0
  %v1251 = vpop.f32.mrb[0].mxu0
  %v1252 = vadd.f32 0.0, %v1251
  %v1253 = vpop.f32.mrb[0].mxu0
  %1254 = vmatprep.mubr.bf16.mxu0 0
  %1255 = vmatmul.mubr.bf16.gmra.mrb[0].mxu0 %v1171
  %v1256 = vpop.f32.mrb[0].mxu0
  %v1257 = vadd.f32 0.0, %v1256
  %v1258 = vpop.f32.mrb[0].mxu0
  %v1259 = vpop.f32.mrb[0].mxu0
  %v1260 = vadd.f32 0.0, %v1259
  %v1261 = vpop.f32.mrb[0].mxu0
  %1262 = vmatprep.mubr.bf16.mxu0 0
  %1263 = vmatmul.mubr.bf16.gmra.mrb[0].mxu0 %v1172
  %v1264 = vpop.f32.mrb[0].mxu0
  %v1265 = vadd.f32 0.0, %v1264
  %v1266 = vpop.f32.mrb[0].mxu0
  %v1267 = vpop.f32.mrb[0].mxu0
  %v1268 = vadd.f32 0.0, %v1267
  %v1269 = vpop.f32.mrb[0].mxu0
  %1270 = vmatprep.mubr.bf16.mxu0 0
  %1271 = vmatmul.mubr.bf16.gmra.mrb[0].mxu0 %v1173
  %v1272 = vpop.f32.mrb[0].mxu0
  %v1273 = vadd.f32 0.0, %v1272
  %v1274 = vpop.f32.mrb[0].mxu0
  %v1275 = vpop.f32.mrb[0].mxu0
  %v1276 = vadd.f32 0.0, %v1275
  %v1277 = vpop.f32.mrb[0].mxu0
  %1278 = vdwg.mxu0
  %v1279 = vpack.c.bf16 %v1220, %v1217
  %v1280 = vpack.c.bf16 %v1228, %v1225
  %v1281 = vpack.c.bf16 %v1236, %v1233
  %v1282 = vpack.c.bf16 %v1244, %v1241
  %v1283 = vpack.c.bf16 %v1252, %v1249
  %v1284 = vpack.c.bf16 %v1260, %v1257
  %v1285 = vpack.c.bf16 %v1268, %v1265
  %v1286 = vpack.c.bf16 %v1276, %v1273
  %v1287 = vld [vmem:[%s3 + $0x40] sm:$0xff]
  %v1288 = vpack.c.bf16 %v1287, %v1287
  %v1290 = vsel %vm447, %v1279, 0
  %v1293 = vsel %vm447, %v1280, 0
  %v1296 = vsel %vm454, %v1288, 0
  %1298 = vmatprep.subr.bf16.mxu0 0
  %1299 = vmatpush1.bf16.msra.mxu0 %v1296
  %1300 = vmatprep.subr.bf16.mxu0 0
  %1301 = vmatpush1.bf16.msra.mxu0 0
  %1302 = vmatprep.subr.bf16.mxu0 0
  %1303 = vmatpush1.bf16.msra.mxu0 0
  %1304 = vmatprep.subr.bf16.mxu0 0
  %1305 = vmatpush1.bf16.msra.mxu0 0
  %1306 = vmatprep.subr.bf16.mxu0 0
  %1307 = vmatpush1.bf16.msra.mxu0 0
  %1308 = vmatprep.subr.bf16.mxu0 0
  %1309 = vmatpush1.bf16.msra.mxu0 0
  %1310 = vmatprep.subr.bf16.mxu0 0
  %1311 = vmatpush1.bf16.msra.mxu0 0
  %1312 = vmatprep.subr.bf16.mxu0 0
  %1313 = vmatpush1.bf16.msra.mxu0 0
  %1314 = vmatprep.subr.bf16.mxu0 0
  %1315 = vmatpush1.bf16.msra.mxu0 0
  %1316 = vmatprep.subr.bf16.mxu0 0
  %1317 = vmatpush1.bf16.msra.mxu0 0
  %1318 = vmatprep.subr.bf16.mxu0 0
  %1319 = vmatpush1.bf16.msra.mxu0 0
  %1320 = vmatprep.subr.bf16.mxu0 0
  %1321 = vmatpush1.bf16.msra.mxu0 0
  %1322 = vmatprep.subr.bf16.mxu0 0
  %1323 = vmatpush1.bf16.msra.mxu0 0
  %1324 = vmatprep.subr.bf16.mxu0 0
  %1325 = vmatpush1.bf16.msra.mxu0 0
  %1326 = vmatprep.subr.bf16.mxu0 0
  %1327 = vmatpush1.bf16.msra.mxu0 0
  %1328 = vmatprep.subr.bf16.mxu0 0
  %1329 = vmatpush1.bf16.msra.mxu0 0
  %1330 = vmatprep.mubr.bf16.mxu0 0
  %1331 = vmatmul.mubr.bf16.gmra.mrb[0].mxu0 %v1290
  %v1332 = vpop.f32.mrb[0].mxu0
  %v1333 = vadd.f32 0.0, %v1332
  %v1334 = vpop.f32.mrb[0].mxu0
  %v1335 = vpop.f32.mrb[0].mxu0
  %v1336 = vadd.f32 0.0, %v1335
  %v1337 = vpop.f32.mrb[0].mxu0
  %1338 = vmatprep.mubr.bf16.mxu0 0
  %1339 = vmatmul.mubr.bf16.gmra.mrb[0].mxu0 %v1293
  %v1340 = vpop.f32.mrb[0].mxu0
  %v1341 = vadd.f32 0.0, %v1340
  %v1342 = vpop.f32.mrb[0].mxu0
  %v1343 = vpop.f32.mrb[0].mxu0
  %v1344 = vadd.f32 0.0, %v1343
  %v1345 = vpop.f32.mrb[0].mxu0
  %1346 = vdwg.mxu0
  %v1347 = vadd.f32 %v1114, %v1333
  %v1348 = vadd.f32 %v1115, %v1336
  %v1349 = vadd.f32 %v1116, %v1341
  %v1350 = vadd.f32 %v1117, %v1344
  %v1351 = vld [vmem:[%s3 + $0x48] sm:$0xff]
  %v1352 = vpack.c.bf16 %v1351, %v1351
  %v1354 = vsel %vm447, %v1281, 0
  %v1357 = vsel %vm447, %v1282, 0
  %v1360 = vsel %vm454, %v1352, 0
  %1362 = vmatprep.subr.bf16.mxu0 0
  %1363 = vmatpush1.bf16.msra.mxu0 %v1360
  %1364 = vmatprep.subr.bf16.mxu0 0
  %1365 = vmatpush1.bf16.msra.mxu0 0
  %1366 = vmatprep.subr.bf16.mxu0 0
  %1367 = vmatpush1.bf16.msra.mxu0 0
  %1368 = vmatprep.subr.bf16.mxu0 0
  %1369 = vmatpush1.bf16.msra.mxu0 0
  %1370 = vmatprep.subr.bf16.mxu0 0
  %1371 = vmatpush1.bf16.msra.mxu0 0
  %1372 = vmatprep.subr.bf16.mxu0 0
  %1373 = vmatpush1.bf16.msra.mxu0 0
  %1374 = vmatprep.subr.bf16.mxu0 0
  %1375 = vmatpush1.bf16.msra.mxu0 0
  %1376 = vmatprep.subr.bf16.mxu0 0
  %1377 = vmatpush1.bf16.msra.mxu0 0
  %1378 = vmatprep.subr.bf16.mxu0 0
  %1379 = vmatpush1.bf16.msra.mxu0 0
  %1380 = vmatprep.subr.bf16.mxu0 0
  %1381 = vmatpush1.bf16.msra.mxu0 0
  %1382 = vmatprep.subr.bf16.mxu0 0
  %1383 = vmatpush1.bf16.msra.mxu0 0
  %1384 = vmatprep.subr.bf16.mxu0 0
  %1385 = vmatpush1.bf16.msra.mxu0 0
  %1386 = vmatprep.subr.bf16.mxu0 0
  %1387 = vmatpush1.bf16.msra.mxu0 0
  %1388 = vmatprep.subr.bf16.mxu0 0
  %1389 = vmatpush1.bf16.msra.mxu0 0
  %1390 = vmatprep.subr.bf16.mxu0 0
  %1391 = vmatpush1.bf16.msra.mxu0 0
  %1392 = vmatprep.subr.bf16.mxu0 0
  %1393 = vmatpush1.bf16.msra.mxu0 0
  %1394 = vmatprep.mubr.bf16.mxu0 0
  %1395 = vmatmul.mubr.bf16.gmra.mrb[0].mxu0 %v1354
  %v1396 = vpop.f32.mrb[0].mxu0
  %v1397 = vadd.f32 0.0, %v1396
  %v1398 = vpop.f32.mrb[0].mxu0
  %v1399 = vpop.f32.mrb[0].mxu0
  %v1400 = vadd.f32 0.0, %v1399
  %v1401 = vpop.f32.mrb[0].mxu0
  %1402 = vmatprep.mubr.bf16.mxu0 0
  %1403 = vmatmul.mubr.bf16.gmra.mrb[0].mxu0 %v1357
  %v1404 = vpop.f32.mrb[0].mxu0
  %v1405 = vadd.f32 0.0, %v1404
  %v1406 = vpop.f32.mrb[0].mxu0
  %v1407 = vpop.f32.mrb[0].mxu0
  %v1408 = vadd.f32 0.0, %v1407
  %v1409 = vpop.f32.mrb[0].mxu0
  %1410 = vdwg.mxu0
  %v1411 = vadd.f32 %v1347, %v1397
  %v1412 = vadd.f32 %v1348, %v1400
  %v1413 = vadd.f32 %v1349, %v1405
  %v1414 = vadd.f32 %v1350, %v1408
  %v1415 = vld [vmem:[%s3 + $0x50] sm:$0xff]
  %v1416 = vpack.c.bf16 %v1415, %v1415
  %v1418 = vsel %vm447, %v1283, 0
  %v1421 = vsel %vm447, %v1284, 0
  %v1424 = vsel %vm454, %v1416, 0
  %1426 = vmatprep.subr.bf16.mxu0 0
  %1427 = vmatpush1.bf16.msra.mxu0 %v1424
  %1428 = vmatprep.subr.bf16.mxu0 0
  %1429 = vmatpush1.bf16.msra.mxu0 0
  %1430 = vmatprep.subr.bf16.mxu0 0
  %1431 = vmatpush1.bf16.msra.mxu0 0
  %1432 = vmatprep.subr.bf16.mxu0 0
  %1433 = vmatpush1.bf16.msra.mxu0 0
  %1434 = vmatprep.subr.bf16.mxu0 0
  %1435 = vmatpush1.bf16.msra.mxu0 0
  %1436 = vmatprep.subr.bf16.mxu0 0
  %1437 = vmatpush1.bf16.msra.mxu0 0
  %1438 = vmatprep.subr.bf16.mxu0 0
  %1439 = vmatpush1.bf16.msra.mxu0 0
  %1440 = vmatprep.subr.bf16.mxu0 0
  %1441 = vmatpush1.bf16.msra.mxu0 0
  %1442 = vmatprep.subr.bf16.mxu0 0
  %1443 = vmatpush1.bf16.msra.mxu0 0
  %1444 = vmatprep.subr.bf16.mxu0 0
  %1445 = vmatpush1.bf16.msra.mxu0 0
  %1446 = vmatprep.subr.bf16.mxu0 0
  %1447 = vmatpush1.bf16.msra.mxu0 0
  %1448 = vmatprep.subr.bf16.mxu0 0
  %1449 = vmatpush1.bf16.msra.mxu0 0
  %1450 = vmatprep.subr.bf16.mxu0 0
  %1451 = vmatpush1.bf16.msra.mxu0 0
  %1452 = vmatprep.subr.bf16.mxu0 0
  %1453 = vmatpush1.bf16.msra.mxu0 0
  %1454 = vmatprep.subr.bf16.mxu0 0
  %1455 = vmatpush1.bf16.msra.mxu0 0
  %1456 = vmatprep.subr.bf16.mxu0 0
  %1457 = vmatpush1.bf16.msra.mxu0 0
  %1458 = vmatprep.mubr.bf16.mxu0 0
  %1459 = vmatmul.mubr.bf16.gmra.mrb[0].mxu0 %v1418
  %v1460 = vpop.f32.mrb[0].mxu0
  %v1461 = vadd.f32 0.0, %v1460
  %v1462 = vpop.f32.mrb[0].mxu0
  %v1463 = vpop.f32.mrb[0].mxu0
  %v1464 = vadd.f32 0.0, %v1463
  %v1465 = vpop.f32.mrb[0].mxu0
  %1466 = vmatprep.mubr.bf16.mxu0 0
  %1467 = vmatmul.mubr.bf16.gmra.mrb[0].mxu0 %v1421
  %v1468 = vpop.f32.mrb[0].mxu0
  %v1469 = vadd.f32 0.0, %v1468
  %v1470 = vpop.f32.mrb[0].mxu0
  %v1471 = vpop.f32.mrb[0].mxu0
  %v1472 = vadd.f32 0.0, %v1471
  %v1473 = vpop.f32.mrb[0].mxu0
  %1474 = vdwg.mxu0
  %v1475 = vadd.f32 %v1411, %v1461
  %v1476 = vadd.f32 %v1412, %v1464
  %v1477 = vadd.f32 %v1413, %v1469
  %v1478 = vadd.f32 %v1414, %v1472
  %v1479 = vld [vmem:[%s3 + $0x58] sm:$0xff]
  %v1480 = vpack.c.bf16 %v1479, %v1479
  %v1482 = vsel %vm447, %v1285, 0
  %v1485 = vsel %vm447, %v1286, 0
  %v1488 = vsel %vm454, %v1480, 0
  %1490 = vmatprep.subr.bf16.mxu0 0
  %1491 = vmatpush1.bf16.msra.mxu0 %v1488
  %1492 = vmatprep.subr.bf16.mxu0 0
  %1493 = vmatpush1.bf16.msra.mxu0 0
  %1494 = vmatprep.subr.bf16.mxu0 0
  %1495 = vmatpush1.bf16.msra.mxu0 0
  %1496 = vmatprep.subr.bf16.mxu0 0
  %1497 = vmatpush1.bf16.msra.mxu0 0
  %1498 = vmatprep.subr.bf16.mxu0 0
  %1499 = vmatpush1.bf16.msra.mxu0 0
  %1500 = vmatprep.subr.bf16.mxu0 0
  %1501 = vmatpush1.bf16.msra.mxu0 0
  %1502 = vmatprep.subr.bf16.mxu0 0
  %1503 = vmatpush1.bf16.msra.mxu0 0
  %1504 = vmatprep.subr.bf16.mxu0 0
  %1505 = vmatpush1.bf16.msra.mxu0 0
  %1506 = vmatprep.subr.bf16.mxu0 0
  %1507 = vmatpush1.bf16.msra.mxu0 0
  %1508 = vmatprep.subr.bf16.mxu0 0
  %1509 = vmatpush1.bf16.msra.mxu0 0
  %1510 = vmatprep.subr.bf16.mxu0 0
  %1511 = vmatpush1.bf16.msra.mxu0 0
  %1512 = vmatprep.subr.bf16.mxu0 0
  %1513 = vmatpush1.bf16.msra.mxu0 0
  %1514 = vmatprep.subr.bf16.mxu0 0
  %1515 = vmatpush1.bf16.msra.mxu0 0
  %1516 = vmatprep.subr.bf16.mxu0 0
  %1517 = vmatpush1.bf16.msra.mxu0 0
  %1518 = vmatprep.subr.bf16.mxu0 0
  %1519 = vmatpush1.bf16.msra.mxu0 0
  %1520 = vmatprep.subr.bf16.mxu0 0
  %1521 = vmatpush1.bf16.msra.mxu0 0
  %1522 = vmatprep.mubr.bf16.mxu0 0
  %1523 = vmatmul.mubr.bf16.gmra.mrb[0].mxu0 %v1482
  %v1524 = vpop.f32.mrb[0].mxu0
  %v1525 = vadd.f32 0.0, %v1524
  %v1526 = vpop.f32.mrb[0].mxu0
  %v1527 = vpop.f32.mrb[0].mxu0
  %v1528 = vadd.f32 0.0, %v1527
  %v1529 = vpop.f32.mrb[0].mxu0
  %1530 = vmatprep.mubr.bf16.mxu0 0
  %1531 = vmatmul.mubr.bf16.gmra.mrb[0].mxu0 %v1485
  %v1532 = vpop.f32.mrb[0].mxu0
  %v1533 = vadd.f32 0.0, %v1532
  %v1534 = vpop.f32.mrb[0].mxu0
  %v1535 = vpop.f32.mrb[0].mxu0
  %v1536 = vadd.f32 0.0, %v1535
  %v1537 = vpop.f32.mrb[0].mxu0
  %1538 = vdwg.mxu0
  %v1539 = vadd.f32 %v1475, %v1525
  %v1540 = vadd.f32 %v1476, %v1528
  %v1541 = vadd.f32 %v1477, %v1533
  %v1542 = vadd.f32 %v1478, %v1536
  %v1543 = vld [vmem:[%s2 + $0xc0] sm:$0xf]
  %v1544 = vld [vmem:[%s2 + $0xc4] sm:$0xf]
  %v1545 = vld [vmem:[%s2 + $0xc8] sm:$0xf]
  %v1546 = vld [vmem:[%s2 + $0xcc] sm:$0xf]
  %v1547 = vld [vmem:[%s2 + $0xd0] sm:$0xf]
  %v1548 = vld [vmem:[%s2 + $0xd4] sm:$0xf]
  %v1549 = vld [vmem:[%s2 + $0xd8] sm:$0xf]
  %v1550 = vld [vmem:[%s2 + $0xdc] sm:$0xf]
  %v1551 = vld [vmem:[%s2 + $0xe0] sm:$0xf]
  %v1552 = vld [vmem:[%s2 + $0xe4] sm:$0xf]
  %v1553 = vld [vmem:[%s2 + $0xe8] sm:$0xf]
  %v1554 = vld [vmem:[%s2 + $0xec] sm:$0xf]
  %v1555 = vld [vmem:[%s2 + $0xf0] sm:$0xf]
  %v1556 = vld [vmem:[%s2 + $0xf4] sm:$0xf]
  %v1557 = vld [vmem:[%s2 + $0xf8] sm:$0xf]
  %v1558 = vld [vmem:[%s2 + $0xfc] sm:$0xf]
  %v1575 = vunpack.c.l.b16 %v1543
  %v1576 = vunpack.c.l.b16 %v1544
  %v1577 = vunpack.c.l.b16 %v1545
  %v1578 = vunpack.c.l.b16 %v1546
  %v1579 = vunpack.c.l.b16 %v1547
  %v1580 = vunpack.c.l.b16 %v1548
  %v1581 = vunpack.c.l.b16 %v1549
  %v1582 = vunpack.c.l.b16 %v1550
  %v1583 = vunpack.c.l.b16 %v1551
  %v1584 = vunpack.c.l.b16 %v1552
  %v1585 = vunpack.c.l.b16 %v1553
  %v1586 = vunpack.c.l.b16 %v1554
  %v1587 = vunpack.c.l.b16 %v1555
  %v1588 = vunpack.c.l.b16 %v1556
  %v1589 = vunpack.c.l.b16 %v1557
  %v1590 = vunpack.c.l.b16 %v1558
  %v1591 = vpack.c.b16 %v1576, %v1575
  %v1592 = vpack.c.b16 %v1578, %v1577
  %v1593 = vpack.c.b16 %v1580, %v1579
  %v1594 = vpack.c.b16 %v1582, %v1581
  %v1595 = vpack.c.b16 %v1584, %v1583
  %v1596 = vpack.c.b16 %v1586, %v1585
  %v1597 = vpack.c.b16 %v1588, %v1587
  %v1598 = vpack.c.b16 %v1590, %v1589
  %1607 = vmatprep.subr.bf16.mxu0 0
  %1608 = vmatpush1.bf16.msra.mxu0 %v266
  %1609 = vmatprep.subr.bf16.mxu0 0
  %1610 = vmatpush1.bf16.msra.mxu0 %v267
  %1611 = vmatprep.subr.bf16.mxu0 0
  %1612 = vmatpush1.bf16.msra.mxu0 %v268
  %1613 = vmatprep.subr.bf16.mxu0 0
  %1614 = vmatpush1.bf16.msra.mxu0 %v269
  %1615 = vmatprep.subr.bf16.mxu0 0
  %1616 = vmatpush1.bf16.msra.mxu0 %v270
  %1617 = vmatprep.subr.bf16.mxu0 0
  %1618 = vmatpush1.bf16.msra.mxu0 %v271
  %1619 = vmatprep.subr.bf16.mxu0 0
  %1620 = vmatpush1.bf16.msra.mxu0 %v272
  %1621 = vmatprep.subr.bf16.mxu0 0
  %1622 = vmatpush1.bf16.msra.mxu0 %v273
  %1623 = vmatprep.subr.bf16.mxu0 0
  %1624 = vmatpush1.bf16.msra.mxu0 0
  %1625 = vmatprep.subr.bf16.mxu0 0
  %1626 = vmatpush1.bf16.msra.mxu0 0
  %1627 = vmatprep.subr.bf16.mxu0 0
  %1628 = vmatpush1.bf16.msra.mxu0 0
  %1629 = vmatprep.subr.bf16.mxu0 0
  %1630 = vmatpush1.bf16.msra.mxu0 0
  %1631 = vmatprep.subr.bf16.mxu0 0
  %1632 = vmatpush1.bf16.msra.mxu0 0
  %1633 = vmatprep.subr.bf16.mxu0 0
  %1634 = vmatpush1.bf16.msra.mxu0 0
  %1635 = vmatprep.subr.bf16.mxu0 0
  %1636 = vmatpush1.bf16.msra.mxu0 0
  %1637 = vmatprep.subr.bf16.mxu0 0
  %1638 = vmatpush1.bf16.msra.mxu0 0
  %1639 = vmatprep.mubr.bf16.mxu0 0
  %1640 = vmatmul.mubr.bf16.gmra.mrb[0].mxu0 %v1591
  %v1641 = vpop.f32.mrb[0].mxu0
  %v1642 = vadd.f32 0.0, %v1641
  %v1643 = vpop.f32.mrb[0].mxu0
  %v1644 = vpop.f32.mrb[0].mxu0
  %v1645 = vadd.f32 0.0, %v1644
  %v1646 = vpop.f32.mrb[0].mxu0
  %1647 = vmatprep.mubr.bf16.mxu0 0
  %1648 = vmatmul.mubr.bf16.gmra.mrb[0].mxu0 %v1592
  %v1649 = vpop.f32.mrb[0].mxu0
  %v1650 = vadd.f32 0.0, %v1649
  %v1651 = vpop.f32.mrb[0].mxu0
  %v1652 = vpop.f32.mrb[0].mxu0
  %v1653 = vadd.f32 0.0, %v1652
  %v1654 = vpop.f32.mrb[0].mxu0
  %1655 = vmatprep.mubr.bf16.mxu0 0
  %1656 = vmatmul.mubr.bf16.gmra.mrb[0].mxu0 %v1593
  %v1657 = vpop.f32.mrb[0].mxu0
  %v1658 = vadd.f32 0.0, %v1657
  %v1659 = vpop.f32.mrb[0].mxu0
  %v1660 = vpop.f32.mrb[0].mxu0
  %v1661 = vadd.f32 0.0, %v1660
  %v1662 = vpop.f32.mrb[0].mxu0
  %1663 = vmatprep.mubr.bf16.mxu0 0
  %1664 = vmatmul.mubr.bf16.gmra.mrb[0].mxu0 %v1594
  %v1665 = vpop.f32.mrb[0].mxu0
  %v1666 = vadd.f32 0.0, %v1665
  %v1667 = vpop.f32.mrb[0].mxu0
  %v1668 = vpop.f32.mrb[0].mxu0
  %v1669 = vadd.f32 0.0, %v1668
  %v1670 = vpop.f32.mrb[0].mxu0
  %1671 = vmatprep.mubr.bf16.mxu0 0
  %1672 = vmatmul.mubr.bf16.gmra.mrb[0].mxu0 %v1595
  %v1673 = vpop.f32.mrb[0].mxu0
  %v1674 = vadd.f32 0.0, %v1673
  %v1675 = vpop.f32.mrb[0].mxu0
  %v1676 = vpop.f32.mrb[0].mxu0
  %v1677 = vadd.f32 0.0, %v1676
  %v1678 = vpop.f32.mrb[0].mxu0
  %1679 = vmatprep.mubr.bf16.mxu0 0
  %1680 = vmatmul.mubr.bf16.gmra.mrb[0].mxu0 %v1596
  %v1681 = vpop.f32.mrb[0].mxu0
  %v1682 = vadd.f32 0.0, %v1681
  %v1683 = vpop.f32.mrb[0].mxu0
  %v1684 = vpop.f32.mrb[0].mxu0
  %v1685 = vadd.f32 0.0, %v1684
  %v1686 = vpop.f32.mrb[0].mxu0
  %1687 = vmatprep.mubr.bf16.mxu0 0
  %1688 = vmatmul.mubr.bf16.gmra.mrb[0].mxu0 %v1597
  %v1689 = vpop.f32.mrb[0].mxu0
  %v1690 = vadd.f32 0.0, %v1689
  %v1691 = vpop.f32.mrb[0].mxu0
  %v1692 = vpop.f32.mrb[0].mxu0
  %v1693 = vadd.f32 0.0, %v1692
  %v1694 = vpop.f32.mrb[0].mxu0
  %1695 = vmatprep.mubr.bf16.mxu0 0
  %1696 = vmatmul.mubr.bf16.gmra.mrb[0].mxu0 %v1598
  %v1697 = vpop.f32.mrb[0].mxu0
  %v1698 = vadd.f32 0.0, %v1697
  %v1699 = vpop.f32.mrb[0].mxu0
  %v1700 = vpop.f32.mrb[0].mxu0
  %v1701 = vadd.f32 0.0, %v1700
  %v1702 = vpop.f32.mrb[0].mxu0
  %1703 = vdwg.mxu0
  %v1704 = vpack.c.bf16 %v1645, %v1642
  %v1705 = vpack.c.bf16 %v1653, %v1650
  %v1706 = vpack.c.bf16 %v1661, %v1658
  %v1707 = vpack.c.bf16 %v1669, %v1666
  %v1708 = vpack.c.bf16 %v1677, %v1674
  %v1709 = vpack.c.bf16 %v1685, %v1682
  %v1710 = vpack.c.bf16 %v1693, %v1690
  %v1711 = vpack.c.bf16 %v1701, %v1698
  %v1712 = vld [vmem:[%s3 + $0x60] sm:$0xff]
  %v1713 = vpack.c.bf16 %v1712, %v1712
  %v1715 = vsel %vm447, %v1704, 0
  %v1718 = vsel %vm447, %v1705, 0
  %v1721 = vsel %vm454, %v1713, 0
  %1723 = vmatprep.subr.bf16.mxu0 0
  %1724 = vmatpush1.bf16.msra.mxu0 %v1721
  %1725 = vmatprep.subr.bf16.mxu0 0
  %1726 = vmatpush1.bf16.msra.mxu0 0
  %1727 = vmatprep.subr.bf16.mxu0 0
  %1728 = vmatpush1.bf16.msra.mxu0 0
  %1729 = vmatprep.subr.bf16.mxu0 0
  %1730 = vmatpush1.bf16.msra.mxu0 0
  %1731 = vmatprep.subr.bf16.mxu0 0
  %1732 = vmatpush1.bf16.msra.mxu0 0
  %1733 = vmatprep.subr.bf16.mxu0 0
  %1734 = vmatpush1.bf16.msra.mxu0 0
  %1735 = vmatprep.subr.bf16.mxu0 0
  %1736 = vmatpush1.bf16.msra.mxu0 0
  %1737 = vmatprep.subr.bf16.mxu0 0
  %1738 = vmatpush1.bf16.msra.mxu0 0
  %1739 = vmatprep.subr.bf16.mxu0 0
  %1740 = vmatpush1.bf16.msra.mxu0 0
  %1741 = vmatprep.subr.bf16.mxu0 0
  %1742 = vmatpush1.bf16.msra.mxu0 0
  %1743 = vmatprep.subr.bf16.mxu0 0
  %1744 = vmatpush1.bf16.msra.mxu0 0
  %1745 = vmatprep.subr.bf16.mxu0 0
  %1746 = vmatpush1.bf16.msra.mxu0 0
  %1747 = vmatprep.subr.bf16.mxu0 0
  %1748 = vmatpush1.bf16.msra.mxu0 0
  %1749 = vmatprep.subr.bf16.mxu0 0
  %1750 = vmatpush1.bf16.msra.mxu0 0
  %1751 = vmatprep.subr.bf16.mxu0 0
  %1752 = vmatpush1.bf16.msra.mxu0 0
  %1753 = vmatprep.subr.bf16.mxu0 0
  %1754 = vmatpush1.bf16.msra.mxu0 0
  %1755 = vmatprep.mubr.bf16.mxu0 0
  %1756 = vmatmul.mubr.bf16.gmra.mrb[0].mxu0 %v1715
  %v1757 = vpop.f32.mrb[0].mxu0
  %v1758 = vadd.f32 0.0, %v1757
  %v1759 = vpop.f32.mrb[0].mxu0
  %v1760 = vpop.f32.mrb[0].mxu0
  %v1761 = vadd.f32 0.0, %v1760
  %v1762 = vpop.f32.mrb[0].mxu0
  %1763 = vmatprep.mubr.bf16.mxu0 0
  %1764 = vmatmul.mubr.bf16.gmra.mrb[0].mxu0 %v1718
  %v1765 = vpop.f32.mrb[0].mxu0
  %v1766 = vadd.f32 0.0, %v1765
  %v1767 = vpop.f32.mrb[0].mxu0
  %v1768 = vpop.f32.mrb[0].mxu0
  %v1769 = vadd.f32 0.0, %v1768
  %v1770 = vpop.f32.mrb[0].mxu0
  %1771 = vdwg.mxu0
  %v1772 = vadd.f32 %v1539, %v1758
  %v1773 = vadd.f32 %v1540, %v1761
  %v1774 = vadd.f32 %v1541, %v1766
  %v1775 = vadd.f32 %v1542, %v1769
  %v1776 = vld [vmem:[%s3 + $0x68] sm:$0xff]
  %v1777 = vpack.c.bf16 %v1776, %v1776
  %v1779 = vsel %vm447, %v1706, 0
  %v1782 = vsel %vm447, %v1707, 0
  %v1785 = vsel %vm454, %v1777, 0
  %1787 = vmatprep.subr.bf16.mxu0 0
  %1788 = vmatpush1.bf16.msra.mxu0 %v1785
  %1789 = vmatprep.subr.bf16.mxu0 0
  %1790 = vmatpush1.bf16.msra.mxu0 0
  %1791 = vmatprep.subr.bf16.mxu0 0
  %1792 = vmatpush1.bf16.msra.mxu0 0
  %1793 = vmatprep.subr.bf16.mxu0 0
  %1794 = vmatpush1.bf16.msra.mxu0 0
  %1795 = vmatprep.subr.bf16.mxu0 0
  %1796 = vmatpush1.bf16.msra.mxu0 0
  %1797 = vmatprep.subr.bf16.mxu0 0
  %1798 = vmatpush1.bf16.msra.mxu0 0
  %1799 = vmatprep.subr.bf16.mxu0 0
  %1800 = vmatpush1.bf16.msra.mxu0 0
  %1801 = vmatprep.subr.bf16.mxu0 0
  %1802 = vmatpush1.bf16.msra.mxu0 0
  %1803 = vmatprep.subr.bf16.mxu0 0
  %1804 = vmatpush1.bf16.msra.mxu0 0
  %1805 = vmatprep.subr.bf16.mxu0 0
  %1806 = vmatpush1.bf16.msra.mxu0 0
  %1807 = vmatprep.subr.bf16.mxu0 0
  %1808 = vmatpush1.bf16.msra.mxu0 0
  %1809 = vmatprep.subr.bf16.mxu0 0
  %1810 = vmatpush1.bf16.msra.mxu0 0
  %1811 = vmatprep.subr.bf16.mxu0 0
  %1812 = vmatpush1.bf16.msra.mxu0 0
  %1813 = vmatprep.subr.bf16.mxu0 0
  %1814 = vmatpush1.bf16.msra.mxu0 0
  %1815 = vmatprep.subr.bf16.mxu0 0
  %1816 = vmatpush1.bf16.msra.mxu0 0
  %1817 = vmatprep.subr.bf16.mxu0 0
  %1818 = vmatpush1.bf16.msra.mxu0 0
  %1819 = vmatprep.mubr.bf16.mxu0 0
  %1820 = vmatmul.mubr.bf16.gmra.mrb[0].mxu0 %v1779
  %v1821 = vpop.f32.mrb[0].mxu0
  %v1822 = vadd.f32 0.0, %v1821
  %v1823 = vpop.f32.mrb[0].mxu0
  %v1824 = vpop.f32.mrb[0].mxu0
  %v1825 = vadd.f32 0.0, %v1824
  %v1826 = vpop.f32.mrb[0].mxu0
  %1827 = vmatprep.mubr.bf16.mxu0 0
  %1828 = vmatmul.mubr.bf16.gmra.mrb[0].mxu0 %v1782
  %v1829 = vpop.f32.mrb[0].mxu0
  %v1830 = vadd.f32 0.0, %v1829
  %v1831 = vpop.f32.mrb[0].mxu0
  %v1832 = vpop.f32.mrb[0].mxu0
  %v1833 = vadd.f32 0.0, %v1832
  %v1834 = vpop.f32.mrb[0].mxu0
  %1835 = vdwg.mxu0
  %v1836 = vadd.f32 %v1772, %v1822
  %v1837 = vadd.f32 %v1773, %v1825
  %v1838 = vadd.f32 %v1774, %v1830
  %v1839 = vadd.f32 %v1775, %v1833
  %v1840 = vld [vmem:[%s3 + $0x70] sm:$0xff]
  %v1841 = vpack.c.bf16 %v1840, %v1840
  %v1843 = vsel %vm447, %v1708, 0
  %v1846 = vsel %vm447, %v1709, 0
  %v1849 = vsel %vm454, %v1841, 0
  %1851 = vmatprep.subr.bf16.mxu0 0
  %1852 = vmatpush1.bf16.msra.mxu0 %v1849
  %1853 = vmatprep.subr.bf16.mxu0 0
  %1854 = vmatpush1.bf16.msra.mxu0 0
  %1855 = vmatprep.subr.bf16.mxu0 0
  %1856 = vmatpush1.bf16.msra.mxu0 0
  %1857 = vmatprep.subr.bf16.mxu0 0
  %1858 = vmatpush1.bf16.msra.mxu0 0
  %1859 = vmatprep.subr.bf16.mxu0 0
  %1860 = vmatpush1.bf16.msra.mxu0 0
  %1861 = vmatprep.subr.bf16.mxu0 0
  %1862 = vmatpush1.bf16.msra.mxu0 0
  %1863 = vmatprep.subr.bf16.mxu0 0
  %1864 = vmatpush1.bf16.msra.mxu0 0
  %1865 = vmatprep.subr.bf16.mxu0 0
  %1866 = vmatpush1.bf16.msra.mxu0 0
  %1867 = vmatprep.subr.bf16.mxu0 0
  %1868 = vmatpush1.bf16.msra.mxu0 0
  %1869 = vmatprep.subr.bf16.mxu0 0
  %1870 = vmatpush1.bf16.msra.mxu0 0
  %1871 = vmatprep.subr.bf16.mxu0 0
  %1872 = vmatpush1.bf16.msra.mxu0 0
  %1873 = vmatprep.subr.bf16.mxu0 0
  %1874 = vmatpush1.bf16.msra.mxu0 0
  %1875 = vmatprep.subr.bf16.mxu0 0
  %1876 = vmatpush1.bf16.msra.mxu0 0
  %1877 = vmatprep.subr.bf16.mxu0 0
  %1878 = vmatpush1.bf16.msra.mxu0 0
  %1879 = vmatprep.subr.bf16.mxu0 0
  %1880 = vmatpush1.bf16.msra.mxu0 0
  %1881 = vmatprep.subr.bf16.mxu0 0
  %1882 = vmatpush1.bf16.msra.mxu0 0
  %1883 = vmatprep.mubr.bf16.mxu0 0
  %1884 = vmatmul.mubr.bf16.gmra.mrb[0].mxu0 %v1843
  %v1885 = vpop.f32.mrb[0].mxu0
  %v1886 = vadd.f32 0.0, %v1885
  %v1887 = vpop.f32.mrb[0].mxu0
  %v1888 = vpop.f32.mrb[0].mxu0
  %v1889 = vadd.f32 0.0, %v1888
  %v1890 = vpop.f32.mrb[0].mxu0
  %1891 = vmatprep.mubr.bf16.mxu0 0
  %1892 = vmatmul.mubr.bf16.gmra.mrb[0].mxu0 %v1846
  %v1893 = vpop.f32.mrb[0].mxu0
  %v1894 = vadd.f32 0.0, %v1893
  %v1895 = vpop.f32.mrb[0].mxu0
  %v1896 = vpop.f32.mrb[0].mxu0
  %v1897 = vadd.f32 0.0, %v1896
  %v1898 = vpop.f32.mrb[0].mxu0
  %1899 = vdwg.mxu0
  %v1900 = vadd.f32 %v1836, %v1886
  %v1901 = vadd.f32 %v1837, %v1889
  %v1902 = vadd.f32 %v1838, %v1894
  %v1903 = vadd.f32 %v1839, %v1897
  %v1904 = vld [vmem:[%s3 + $0x78] sm:$0xff]
  %v1905 = vpack.c.bf16 %v1904, %v1904
  %v1907 = vsel %vm447, %v1710, 0
  %v1910 = vsel %vm447, %v1711, 0
  %v1913 = vsel %vm454, %v1905, 0
  %1915 = vmatprep.subr.bf16.mxu0 0
  %1916 = vmatpush1.bf16.msra.mxu0 %v1913
  %1917 = vmatprep.subr.bf16.mxu0 0
  %1918 = vmatpush1.bf16.msra.mxu0 0
  %1919 = vmatprep.subr.bf16.mxu0 0
  %1920 = vmatpush1.bf16.msra.mxu0 0
  %1921 = vmatprep.subr.bf16.mxu0 0
  %1922 = vmatpush1.bf16.msra.mxu0 0
  %1923 = vmatprep.subr.bf16.mxu0 0
  %1924 = vmatpush1.bf16.msra.mxu0 0
  %1925 = vmatprep.subr.bf16.mxu0 0
  %1926 = vmatpush1.bf16.msra.mxu0 0
  %1927 = vmatprep.subr.bf16.mxu0 0
  %1928 = vmatpush1.bf16.msra.mxu0 0
  %1929 = vmatprep.subr.bf16.mxu0 0
  %1930 = vmatpush1.bf16.msra.mxu0 0
  %1931 = vmatprep.subr.bf16.mxu0 0
  %1932 = vmatpush1.bf16.msra.mxu0 0
  %1933 = vmatprep.subr.bf16.mxu0 0
  %1934 = vmatpush1.bf16.msra.mxu0 0
  %1935 = vmatprep.subr.bf16.mxu0 0
  %1936 = vmatpush1.bf16.msra.mxu0 0
  %1937 = vmatprep.subr.bf16.mxu0 0
  %1938 = vmatpush1.bf16.msra.mxu0 0
  %1939 = vmatprep.subr.bf16.mxu0 0
  %1940 = vmatpush1.bf16.msra.mxu0 0
  %1941 = vmatprep.subr.bf16.mxu0 0
  %1942 = vmatpush1.bf16.msra.mxu0 0
  %1943 = vmatprep.subr.bf16.mxu0 0
  %1944 = vmatpush1.bf16.msra.mxu0 0
  %1945 = vmatprep.subr.bf16.mxu0 0
  %1946 = vmatpush1.bf16.msra.mxu0 0
  %1947 = vmatprep.mubr.bf16.mxu0 0
  %1948 = vmatmul.mubr.bf16.gmra.mrb[0].mxu0 %v1907
  %v1949 = vpop.f32.mrb[0].mxu0
  %v1950 = vadd.f32 0.0, %v1949
  %v1951 = vpop.f32.mrb[0].mxu0
  %v1952 = vpop.f32.mrb[0].mxu0
  %v1953 = vadd.f32 0.0, %v1952
  %v1954 = vpop.f32.mrb[0].mxu0
  %1955 = vmatprep.mubr.bf16.mxu0 0
  %1956 = vmatmul.mubr.bf16.gmra.mrb[0].mxu0 %v1910
  %v1957 = vpop.f32.mrb[0].mxu0
  %v1958 = vadd.f32 0.0, %v1957
  %v1959 = vpop.f32.mrb[0].mxu0
  %v1960 = vpop.f32.mrb[0].mxu0
  %v1961 = vadd.f32 0.0, %v1960
  %v1962 = vpop.f32.mrb[0].mxu0
  %1963 = vdwg.mxu0
  %v1964 = vadd.f32 %v1900, %v1950
  %v1965 = vadd.f32 %v1901, %v1953
  %v1966 = vadd.f32 %v1902, %v1958
  %v1967 = vadd.f32 %v1903, %v1961
  %v1968 = vld [vmem:[%s4] sm:$0x3]
  %vm1969 = vcmask 130048
  %v1970 = vsel %vm1969, %v1964, 0.0
  %v1971 = vsel %vm1969, %v1965, 0.0
  %v1972 = vadd.f32 %v1970, %v1971
  %v1973 = vsel %vm1969, %v1966, 0.0
  %v1974 = vadd.f32 %v1972, %v1973
  %v1975 = vsel %vm1969, %v1967, 0.0
  %v1976 = vadd.f32 %v1974, %v1975
  %v1977 = vrot.slane %v1976, 4
  %v1978 = vadd.f32 %v1976, %v1977
  %v1979 = vrot.slane %v1978, 2
  %v1980 = vadd.f32 %v1978, %v1979
  %v1981 = vrot.slane %v1980, 1
  %v1982 = vadd.f32 %v1980, %v1981
  %v1983 = vmul.f32 %v1982, 0.03125
  %v1984 = vmul.f32 %v1964, %v1964
  %v1985 = vmul.f32 %v1965, %v1965
  %v1986 = vmul.f32 %v1966, %v1966
  %v1987 = vmul.f32 %v1967, %v1967
  %v1988 = vsel %vm1969, %v1984, 0.0
  %v1989 = vsel %vm1969, %v1985, 0.0
  %v1990 = vadd.f32 %v1988, %v1989
  %v1991 = vsel %vm1969, %v1986, 0.0
  %v1992 = vadd.f32 %v1990, %v1991
  %v1993 = vsel %vm1969, %v1987, 0.0
  %v1994 = vadd.f32 %v1992, %v1993
  %v1995 = vrot.slane %v1994, 4
  %v1996 = vadd.f32 %v1994, %v1995
  %v1997 = vrot.slane %v1996, 2
  %v1998 = vadd.f32 %v1996, %v1997
  %v1999 = vrot.slane %v1998, 1
  %v2000 = vadd.f32 %v1998, %v1999
  %v2001 = vmul.f32 %v2000, 0.03125
  %v2002 = vmul.f32 %v1983, %v1983
  %v2003 = vsub.f32 %v2001, %v2002
  %v2004 = vmax.f32 %v2003, 0.0
  %v2005 = vadd.f32 %v2004, 1e-05
  %v2006 = vrsqrt.pop %v2005
  %v2007 = vmul.f32 %v1968, %v2006
  %v2008 = vmul.f32 %v1983, %v2007
  %v2010 = vrot.slane %v2008, 7
  %v2012 = vsub.f32 %v1968, %v2010
  %v2013 = vlaneseq
  %v2014 = vshrl.u32 %v2013, 7
  %v2015 = vsub.s32 0, %v2014
  %v2016 = vrot.slane %v2007, %v2015
  %v2017 = vmul.f32 %v1964, %v2016
  %v2018 = vmul.f32 %v1965, %v2016
  %v2019 = vmul.f32 %v1966, %v2016
  %v2020 = vmul.f32 %v1967, %v2016
  %v2021 = vlaneseq
  %v2022 = vshrl.u32 %v2021, 7
  %v2023 = vsub.s32 1, %v2022
  %v2024 = vrot.slane %v2012, %v2023
  %v2025 = vadd.f32 %v2017, %v2024
  %v2026 = vadd.f32 %v2018, %v2024
  %v2027 = vadd.f32 %v2019, %v2024
  %v2028 = vadd.f32 %v2020, %v2024
  %v2029 = vmul.f32 %v2025, 0.2
  %v2030 = vmul.f32 %v2026, 0.2
  %v2031 = vmul.f32 %v2027, 0.2
  %v2032 = vmul.f32 %v2028, 0.2
  %v2033 = vmax.f32 %v2025, %v2029
  %v2034 = vmax.f32 %v2026, %v2030
  %v2035 = vmax.f32 %v2027, %v2031
  %v2036 = vmax.f32 %v2028, %v2032
  %v2037 = vld [vmem:[%s5] sm:$0xff]
  %v2038 = vld [vmem:[%s5 + $0x8] sm:$0xff]
  %v2039 = vld [vmem:[%s5 + $0x10] sm:$0xff]
  %v2040 = vld [vmem:[%s5 + $0x18] sm:$0xff]
  %v2041 = vmul.f32 %v2033, %v2037
  %v2042 = vmul.f32 %v2034, %v2038
  %v2043 = vmul.f32 %v2035, %v2039
  %v2044 = vmul.f32 %v2036, %v2040
  %v2045 = vsel %vm1969, %v2041, 0.0
  %2046 = vadd.xlane.f32.xlu0 %v2045
  %v2047 = vpop.xlane.xlu0 %2046
  %v2048 = vsel %vm1969, %v2042, 0.0
  %2049 = vadd.xlane.f32.xlu0 %v2048
  %v2050 = vpop.xlane.xlu0 %2049
  %v2051 = vsel %vm1969, %v2043, 0.0
  %2052 = vadd.xlane.f32.xlu0 %v2051
  %v2053 = vpop.xlane.xlu0 %2052
  %v2054 = vsel %vm1969, %v2044, 0.0
  %2055 = vadd.xlane.f32.xlu0 %v2054
  %v2056 = vpop.xlane.xlu0 %2055
  %v2057 = vlaneseq
  %v2058 = vshrl.u32 %v2057, 7
  %v2059 = vlaneseq
  %v2060 = vand.u32 %v2059, 127
  %v2061 = vmul.u32 %v2058, 16
  %vm2062 = vcmp.ge.s32.totalorder %v2060, %v2061
  %v2063 = vadd.s32 %v2058, 1
  %v2064 = vmul.u32 %v2063, 16
  %vm2065 = vcmp.lt.s32.totalorder %v2060, %v2064
  %vm2066 = vmand %vm2062, %vm2065
  %v2067 = vsel %vm2066, 1, 0
  %v2068 = vcvt.s32.f32 %v2067
  %vm2069 = vcmask 261120
  %v2071 = vsel %vm2069, %v2068, 0
  %2073 = vmatprep.subr.mxu0 0.0
  %2074 = vmatpush1.msra.mxu0 %v2047
  %2075 = vmatprep.subr.mxu0 0.0
  %2076 = vmatpush1.msra.mxu0 %v2050
  %2077 = vmatprep.subr.mxu0 0.0
  %2078 = vmatpush1.msra.mxu0 %v2053
  %2079 = vmatprep.subr.mxu0 0.0
  %2080 = vmatpush1.msra.mxu0 %v2056
  %2081 = vmatprep.subr.mxu0 0.0
  %2082 = vmatpush1.msra.mxu0 0.0
  %2083 = vmatprep.subr.mxu0 0.0
  %2084 = vmatpush1.msra.mxu0 0.0
  %2085 = vmatprep.subr.mxu0 0.0
  %2086 = vmatpush1.msra.mxu0 0.0
  %2087 = vmatprep.subr.mxu0 0.0
  %2088 = vmatpush1.msra.mxu0 0.0
  %2089 = vmatprep.subr.mxu0 0.0
  %2090 = vmatpush1.msra.mxu0 0.0
  %2091 = vmatprep.subr.mxu0 0.0
  %2092 = vmatpush1.msra.mxu0 0.0
  %2093 = vmatprep.subr.mxu0 0.0
  %2094 = vmatpush1.msra.mxu0 0.0
  %2095 = vmatprep.subr.mxu0 0.0
  %2096 = vmatpush1.msra.mxu0 0.0
  %2097 = vmatprep.subr.mxu0 0.0
  %2098 = vmatpush1.msra.mxu0 0.0
  %2099 = vmatprep.subr.mxu0 0.0
  %2100 = vmatpush1.msra.mxu0 0.0
  %2101 = vmatprep.subr.mxu0 0.0
  %2102 = vmatpush1.msra.mxu0 0.0
  %2103 = vmatprep.subr.mxu0 0.0
  %2104 = vmatpush1.msra.mxu0 0.0
  %2105 = vmatprep.subr.mxu0 0.0
  %2106 = vmatpush1.msra.mxu0 0.0
  %2107 = vmatprep.subr.mxu0 0.0
  %2108 = vmatpush1.msra.mxu0 0.0
  %2109 = vmatprep.subr.mxu0 0.0
  %2110 = vmatpush1.msra.mxu0 0.0
  %2111 = vmatprep.subr.mxu0 0.0
  %2112 = vmatpush1.msra.mxu0 0.0
  %2113 = vmatprep.subr.mxu0 0.0
  %2114 = vmatpush1.msra.mxu0 0.0
  %2115 = vmatprep.subr.mxu0 0.0
  %2116 = vmatpush1.msra.mxu0 0.0
  %2117 = vmatprep.subr.mxu0 0.0
  %2118 = vmatpush1.msra.mxu0 0.0
  %2119 = vmatprep.subr.mxu0 0.0
  %2120 = vmatpush1.msra.mxu0 0.0
  %2121 = vmatprep.subr.mxu0 0.0
  %2122 = vmatpush1.msra.mxu0 0.0
  %2123 = vmatprep.subr.mxu0 0.0
  %2124 = vmatpush1.msra.mxu0 0.0
  %2125 = vmatprep.subr.mxu0 0.0
  %2126 = vmatpush1.msra.mxu0 0.0
  %2127 = vmatprep.subr.mxu0 0.0
  %2128 = vmatpush1.msra.mxu0 0.0
  %2129 = vmatprep.subr.mxu0 0.0
  %2130 = vmatpush1.msra.mxu0 0.0
  %2131 = vmatprep.subr.mxu0 0.0
  %2132 = vmatpush1.msra.mxu0 0.0
  %2133 = vmatprep.subr.mxu0 0.0
  %2134 = vmatpush1.msra.mxu0 0.0
  %2135 = vmatprep.subr.mxu0 0.0
  %2136 = vmatpush1.msra.mxu0 0.0
  %2137 = vmatprep.mubr.f32.mxu0 0.0
  %2138 = vmatmul.mubr.f32.gmra.mrb[0].mxu0 %v2071
  %v2139 = vpop.f32.mrb[0].mxu0
  %v2140 = vadd.f32 0.0, %v2139
  %v2141 = vpop.f32.mrb[0].mxu0
  %2142 = vdwg.mxu0
  %v2143 = vand.u32 2147483647, %v2140
  %v2144 = vsub.f32 0.0, %v2143
  %v2145 = vmul.f32 %v2144, 1.442695
  %v2146 = vpow.pop %v2145
  %v2147 = vadd.f32 %v2146, 1.0
  %v2148 = vrcp.pop %v2147
  %vm2149 = vcmp.ge.f32.partialorder %v2140, 0.0
  %v2150 = vmul.f32 %v2146, %v2148
  %v2151 = vsel %vm2149, %v2148, %v2150
  %vm2152 = vcmask 1024
  %2153 = vst.msk [vmem:[%s6] sm:$0x3] %vm2152, %v2151
  // Predicated region
  $region26: #{discriminator_forward.1} parent=0 // pred_check
    _
  $region27: #{discriminator_forward.1} parent=0 // pred_check_branch
    %2155 = sbr.rel (0) target = $region29
  $region28: #{discriminator_forward.1} parent=0 // pred_region
    _
  $region29: #{discriminator_forward.1} parent=0 // pred_fallthru
    _
  // Predicated region
  $region30: #{discriminator_forward.1} parent=0 // pred_check
    _
  $region31: #{discriminator_forward.1} parent=0 // pred_check_branch
    %2157 = sbr.rel (0) target = $region33
  $region32: #{discriminator_forward.1} parent=0 // pred_region
    _
  $region33: #{discriminator_forward.1} parent=0 // pred_fallthru
    _

</llo_original>
